<compile_context>
chip_gen: v7x
topology: tpu7x:2x2x1
jax: 0.10.0
libtpu: 0.0.40
codegen_flags: <defaults>
</compile_context>

<pallas_src>
import functools

import jax
import jax.numpy as jnp
from jax import lax
from jax.experimental import pallas as pl
from jax.experimental.pallas import tpu as pltpu


def _round_up(x: int, m: int) -> int:
    return (x + m - 1) // m * m


def _pick_nq_tile(nr_pad: int, nq: int):
    """Pick a lane-dense Nq tile keeping the (Nr, Nq_tile) working set small.

    Budget ~16 MiB for dist_core + row_ids + ~2 live temporaries (4 f32
    planes), which keeps the total well inside v7x's 64 MiB / 32 MiB scoped
    VMEM even with double-buffered inputs/outputs.
    """
    nq128 = _round_up(max(nq, 1), 128)
    budget_elems = (16 * 1024 * 1024) // (4 * 4)      # elements per plane
    cap = max(128, (budget_elems // nr_pad) // 128 * 128)
    tile = min(1024, cap, nq128)
    nq_pad = _round_up(nq128, tile)
    return tile, nq_pad


def _make_knn_kernel(k: int, nr_valid: int):
    def kernel(ref_ref, query_ref, d_ref, i_ref):
        # ref_ref:   (1, Nr_pad, D_pad)   query_ref: (1, D_pad, Nq_tile)
        # d_ref:     (1, k, Nq_tile)      i_ref:     (1, k, Nq_tile)
        r = ref_ref[0]                       # (Nr_pad, D_pad), native dtype
        q = query_ref[0]                     # (D_pad, Nq_tile), native dtype
        nr_pad = r.shape[0]

        # Norms in f32 (VPU work stays f32; matters on v5e with no bf16 VALU).
        rf = r.astype(jnp.float32)
        qf = q.astype(jnp.float32)
        r2 = jnp.sum(rf * rf, axis=1, keepdims=True)          # (Nr_pad, 1)
        q2 = jnp.sum(qf * qf, axis=0, keepdims=True)          # (1, Nq_tile)

        # Mask zero-padded ref rows so they can never be selected.
        if nr_pad != nr_valid:
            rrow = lax.broadcasted_iota(jnp.int32, (nr_pad, 1), 0)
            r2 = jnp.where(rrow < nr_valid, r2, jnp.float32(jnp.inf))

        # Gram term on the MXU; native input dtype, f32 accumulate.
        rq = jnp.dot(r, q, preferred_element_type=jnp.float32,
                     precision=lax.Precision.HIGHEST)          # (Nr_pad, Nq)

        # ||q||^2 is constant per column -> defer it out of the selection.
        dist_core = r2 - 2.0 * rq                              # (Nr_pad, Nq)

        row_ids = lax.broadcasted_iota(jnp.int32, dist_core.shape, 0)

        for kk in range(k):                 # k is small & static -> unrolled
            m = jnp.min(dist_core, axis=0, keepdims=True)          # (1, Nq)
            cand = jnp.where(dist_core == m, row_ids, nr_pad)       # (Nr, Nq)
            idx = jnp.min(cand, axis=0, keepdims=True)              # (1, Nq)
            # Direct row stores (no sublane concatenate); sqrt only on minima.
            d_ref[0, kk:kk + 1, :] = jnp.sqrt(jnp.maximum(m + q2, 0.0))
            i_ref[0, kk:kk + 1, :] = idx
            if kk + 1 < k:
                # Knock out only the selected element, reusing `cand`
                # (cand == idx  <=>  (dist_core == m) & (row_ids == idx)).
                dist_core = jnp.where(cand == idx,
                                      jnp.float32(jnp.inf), dist_core)

    return kernel


@functools.partial(jax.jit, static_argnames=("k",))
def knn_pallas(ref, query, k):
    """ref: (B, D, N_ref), query: (B, D, N_query) -> (D, I) like KNN.forward."""
    assert ref.shape[0] == query.shape[0], (ref.shape, query.shape)
    assert ref.shape[1] == query.shape[1], (ref.shape, query.shape)
    B, D, Nr = ref.shape
    Nq = query.shape[2]
    assert 1 <= k <= Nr, (k, Nr)

    d_pad = _round_up(D, 8)
    nr_pad = _round_up(Nr, 8)
    nq_tile, nq_pad = _pick_nq_tile(nr_pad, Nq)
    n_qt = nq_pad // nq_tile

    # Pad (zeros) and pre-arrange ref as (B, Nr_pad, D_pad); no dtype cast in
    # the wrapper -- inputs flow to the kernel in their native dtype.
    ref_p = jnp.pad(ref, ((0, 0), (0, d_pad - D), (0, nr_pad - Nr)))
    ref_t = jnp.transpose(ref_p, (0, 2, 1))                  # (B, Nr_pad, D_pad)
    query_p = jnp.pad(query, ((0, 0), (0, d_pad - D), (0, nq_pad - Nq)))

    # Explicit VMEM budget (double-buffered ins/outs + the core working set).
    itemsize = jnp.dtype(ref.dtype).itemsize
    core = 4 * nr_pad * nq_tile * 4
    ins = 2 * (nr_pad * d_pad + d_pad * nq_tile) * itemsize
    outs = 2 * k * nq_tile * (4 + 4)
    vmem_limit = int(min(max((core + ins + outs) * 3 // 2, 32 << 20), 48 << 20))

    kernel = _make_knn_kernel(k, Nr)
    d_out, i_out = pl.pallas_call(
        kernel,
        out_shape=(
            jax.ShapeDtypeStruct((B, k, nq_pad), jnp.float32),
            jax.ShapeDtypeStruct((B, k, nq_pad), jnp.int32),
        ),
        grid_spec=pltpu.PrefetchScalarGridSpec(
            num_scalar_prefetch=0,
            grid=(B, n_qt),
            in_specs=[
                pl.BlockSpec((1, nr_pad, d_pad), lambda b, qb: (b, 0, 0)),
                pl.BlockSpec((1, d_pad, nq_tile), lambda b, qb: (b, 0, qb)),
            ],
            out_specs=[
                pl.BlockSpec((1, k, nq_tile), lambda b, qb: (b, 0, qb)),
                pl.BlockSpec((1, k, nq_tile), lambda b, qb: (b, 0, qb)),
            ],
        ),
        compiler_params=pltpu.CompilerParams(
            dimension_semantics=("parallel", "parallel"),
            vmem_limit_bytes=vmem_limit),
    )(ref_t, query_p)
    return d_out[:, :, :Nq], i_out[:, :, :Nq]


def knn_reference(ref, query, k):
    """Pure-JAX reference (lax.top_k) for correctness checking."""
    r2 = jnp.sum(ref * ref, axis=1)                       # (B, Nr)
    q2 = jnp.sum(query * query, axis=1)                   # (B, Nq)
    qr = jnp.einsum("bdm,bdn->bmn", query, ref,
                    precision=lax.Precision.HIGHEST)      # (B, Nq, Nr)
    dist2 = q2[:, :, None] + r2[:, None, :] - 2.0 * qr
    neg_d, idx = lax.top_k(-dist2, k)                     # (B, Nq, k)
    d = jnp.sqrt(jnp.maximum(-neg_d, 0.0))
    return jnp.transpose(d, (0, 2, 1)), jnp.transpose(idx, (0, 2, 1))


def _full_dist(ref, query):
    r2 = jnp.sum(ref * ref, axis=1)
    q2 = jnp.sum(query * query, axis=1)
    qr = jnp.einsum("bdm,bdn->bmn", query, ref,
                    precision=lax.Precision.HIGHEST)
    return jnp.sqrt(jnp.maximum(q2[:, :, None] + r2[:, None, :] - 2.0 * qr, 0.0))


def _check(ref, query, k, exact_index=False):
    d_knl, i_knl = knn_pallas(ref, query, k)
    jax.block_until_ready((d_knl, i_knl))
    d_ref, i_ref = knn_reference(ref, query, k)
    assert d_knl.shape == d_ref.shape and i_knl.shape == i_ref.shape
    assert jnp.allclose(d_knl, d_ref, atol=1e-3, rtol=1e-3), "distance mismatch"
    # Semantic index check: distances gathered at kernel indices must match
    # the reference k smallest distances (robust to exact-tie ordering).
    dist = _full_dist(ref, query)                               # (B, Nq, Nr)
    d_at = jnp.take_along_axis(dist, jnp.transpose(i_knl, (0, 2, 1)), axis=2)
    d_at = jnp.transpose(d_at, (0, 2, 1))
    assert jnp.allclose(d_at, d_ref, atol=1e-3, rtol=1e-3), "index->dist mismatch"
    if exact_index:
        assert jnp.array_equal(i_knl, i_ref.astype(jnp.int32)), "index mismatch"


if __name__ == "__main__":
    key = jax.random.PRNGKey(0)
    k1, k2, k3, k4 = jax.random.split(key, 4)

    # Test 1: small, module-consistent shapes (batch=2, dim=4, 64 ref, 32 query).
    B, DIM, N_REF, N_QUERY, K = 2, 4, 64, 32, 5
    ref = jax.random.normal(k1, (B, DIM, N_REF), dtype=jnp.float32)
    query = jax.random.normal(k2, (B, DIM, N_QUERY), dtype=jnp.float32)
    _check(ref, query, K, exact_index=True)

    # Test 2: non-aligned sizes exercising D/Nr/Nq padding and row masking.
    B2, DIM2, N_REF2, N_QUERY2, K2 = 2, 3, 200, 300, 8
    ref2 = jax.random.normal(k3, (B2, DIM2, N_REF2), dtype=jnp.float32)
    query2 = jax.random.normal(k4, (B2, DIM2, N_QUERY2), dtype=jnp.float32)
    _check(ref2, query2, K2, exact_index=False)

    print("KERNEL_OK")
</pallas_src>

<mosaic_0001>
module attributes {stable_mosaic.version = 11 : i64} {
  func.func @kernel(%arg0: i32, %arg1: i32, %arg2: memref<1x64x8xf32, #tpu.memory_space<vmem>>, %arg3: memref<1x8x128xf32, #tpu.memory_space<vmem>>, %arg4: memref<1x5x128xf32, #tpu.memory_space<vmem>>, %arg5: memref<1x5x128xi32, #tpu.memory_space<vmem>>) attributes {dimension_semantics = [#tpu.dimension_semantics<parallel>, #tpu.dimension_semantics<parallel>], iteration_bounds = array<i64: 2, 1>, scalar_prefetch = 0 : i64, scratch_operands = 0 : i64, tpu.core_type = #tpu.core_type<tc>, window_params = [{transform_indices = @transform_0, window_bounds = array<i64: 1, 64, 8>}, {transform_indices = @transform_1, window_bounds = array<i64: 1, 8, 128>}, {transform_indices = @transform_2, window_bounds = array<i64: 1, 5, 128>}, {transform_indices = @transform_3, window_bounds = array<i64: 1, 5, 128>}]} {
    %c0 = arith.constant 0 : index
    %c0_0 = arith.constant 0 : index
    %c0_1 = arith.constant 0 : index
    %0 = vector.load %arg2[%c0, %c0_0, %c0_1] : memref<1x64x8xf32, #tpu.memory_space<vmem>>, vector<1x64x8xf32>
    %1 = vector.shape_cast %0 : vector<1x64x8xf32> to vector<64x8xf32>
    %c0_2 = arith.constant 0 : index
    %c0_3 = arith.constant 0 : index
    %c0_4 = arith.constant 0 : index
    %2 = vector.load %arg3[%c0_2, %c0_3, %c0_4] : memref<1x8x128xf32, #tpu.memory_space<vmem>>, vector<1x8x128xf32>
    %3 = vector.shape_cast %2 : vector<1x8x128xf32> to vector<8x128xf32>
    %4 = arith.mulf %1, %1 : vector<64x8xf32>
    %cst = arith.constant dense<0.000000e+00> : vector<64xf32>
    %5 = vector.multi_reduction <add>, %4, %cst [1] : vector<64x8xf32> to vector<64xf32>
    %6 = vector.shape_cast %5 : vector<64xf32> to vector<64x1xf32>
    %7 = arith.mulf %3, %3 : vector<8x128xf32>
    %cst_5 = arith.constant dense<0.000000e+00> : vector<128xf32>
    %8 = vector.multi_reduction <add>, %7, %cst_5 [0] : vector<8x128xf32> to vector<128xf32>
    %9 = vector.shape_cast %8 : vector<128xf32> to vector<1x128xf32>
    %cst_6 = arith.constant dense<0.000000e+00> : vector<64x128xf32>
    %10 = tpu.matmul %1, %3, %cst_6 {dimension_numbers = #tpu.dot_dimension_numbers<[1], [0], [0], [1], [0, 0, 1, 1], [], []>, precision = #tpu.contract_precision<fp32>} : vector<64x8xf32>, vector<8x128xf32>, vector<64x128xf32> -> vector<64x128xf32>
    %cst_7 = arith.constant 2.000000e+00 : f32
    %11 = vector.broadcast %cst_7 : f32 to vector<64x128xf32>
    %12 = arith.mulf %11, %10 : vector<64x128xf32>
    %13 = vector.broadcast %6 : vector<64x1xf32> to vector<64x128xf32>
    %14 = arith.subf %13, %12 : vector<64x128xf32>
    %15 = tpu.iota {dimensions = array<i32: 0>} : vector<64x128xi32>
    %cst_8 = arith.constant dense<0x7F800000> : vector<128xf32>
    %16 = vector.multi_reduction <minimumf>, %14, %cst_8 [0] : vector<64x128xf32> to vector<128xf32>
    %17 = vector.shape_cast %16 : vector<128xf32> to vector<1x128xf32>
    %18 = vector.broadcast %17 : vector<1x128xf32> to vector<64x128xf32>
    %19 = arith.cmpf oeq, %14, %18 : vector<64x128xf32>
    %c64_i32 = arith.constant 64 : i32
    %20 = vector.broadcast %c64_i32 : i32 to vector<64x128xi32>
    %21 = arith.select %19, %15, %20 : vector<64x128xi1>, vector<64x128xi32>
    %cst_9 = arith.constant dense<2147483647> : vector<128xi32>
    %22 = vector.multi_reduction <minsi>, %21, %cst_9 [0] : vector<64x128xi32> to vector<128xi32>
    %23 = vector.shape_cast %22 : vector<128xi32> to vector<1x128xi32>
    %24 = arith.addf %17, %9 : vector<1x128xf32>
    %cst_10 = arith.constant 0.000000e+00 : f32
    %25 = vector.broadcast %cst_10 : f32 to vector<1x128xf32>
    %26 = arith.maximumf %24, %25 : vector<1x128xf32>
    %27 = math.sqrt %26 : vector<1x128xf32>
    %c0_11 = arith.constant 0 : index
    %c0_12 = arith.constant 0 : index
    %c0_13 = arith.constant 0 : index
    %28 = vector.load %arg4[%c0_11, %c0_12, %c0_13] : memref<1x5x128xf32, #tpu.memory_space<vmem>>, vector<1x1x128xf32>
    %29 = vector.shape_cast %28 : vector<1x1x128xf32> to vector<1x128xf32>
    %30 = vector.shape_cast %27 : vector<1x128xf32> to vector<1x1x128xf32>
    tpu.vector_store %arg4[%c0_11, %c0_12, %c0_13], %30 {strides = array<i32>} : memref<1x5x128xf32, #tpu.memory_space<vmem>>, vector<1x1x128xf32>,
    %c0_14 = arith.constant 0 : index
    %c0_15 = arith.constant 0 : index
    %c0_16 = arith.constant 0 : index
    %31 = vector.load %arg5[%c0_14, %c0_15, %c0_16] : memref<1x5x128xi32, #tpu.memory_space<vmem>>, vector<1x1x128xi32>
    %32 = vector.shape_cast %31 : vector<1x1x128xi32> to vector<1x128xi32>
    %33 = vector.shape_cast %23 : vector<1x128xi32> to vector<1x1x128xi32>
    tpu.vector_store %arg5[%c0_14, %c0_15, %c0_16], %33 {strides = array<i32>} : memref<1x5x128xi32, #tpu.memory_space<vmem>>, vector<1x1x128xi32>,
    %34 = vector.broadcast %23 : vector<1x128xi32> to vector<64x128xi32>
    %35 = arith.cmpi eq, %21, %34 : vector<64x128xi32>
    %cst_17 = arith.constant 0x7F800000 : f32
    %36 = vector.broadcast %cst_17 : f32 to vector<64x128xf32>
    %37 = arith.select %35, %36, %14 : vector<64x128xi1>, vector<64x128xf32>
    %cst_18 = arith.constant dense<0x7F800000> : vector<128xf32>
    %38 = vector.multi_reduction <minimumf>, %37, %cst_18 [0] : vector<64x128xf32> to vector<128xf32>
    %39 = vector.shape_cast %38 : vector<128xf32> to vector<1x128xf32>
    %40 = vector.broadcast %39 : vector<1x128xf32> to vector<64x128xf32>
    %41 = arith.cmpf oeq, %37, %40 : vector<64x128xf32>
    %c64_i32_19 = arith.constant 64 : i32
    %42 = vector.broadcast %c64_i32_19 : i32 to vector<64x128xi32>
    %43 = arith.select %41, %15, %42 : vector<64x128xi1>, vector<64x128xi32>
    %cst_20 = arith.constant dense<2147483647> : vector<128xi32>
    %44 = vector.multi_reduction <minsi>, %43, %cst_20 [0] : vector<64x128xi32> to vector<128xi32>
    %45 = vector.shape_cast %44 : vector<128xi32> to vector<1x128xi32>
    %46 = arith.addf %39, %9 : vector<1x128xf32>
    %cst_21 = arith.constant 0.000000e+00 : f32
    %47 = vector.broadcast %cst_21 : f32 to vector<1x128xf32>
    %48 = arith.maximumf %46, %47 : vector<1x128xf32>
    %49 = math.sqrt %48 : vector<1x128xf32>
    %c0_22 = arith.constant 0 : index
    %c1 = arith.constant 1 : index
    %c0_23 = arith.constant 0 : index
    %50 = vector.load %arg4[%c0_22, %c1, %c0_23] : memref<1x5x128xf32, #tpu.memory_space<vmem>>, vector<1x1x128xf32>
    %51 = vector.shape_cast %50 : vector<1x1x128xf32> to vector<1x128xf32>
    %52 = vector.shape_cast %49 : vector<1x128xf32> to vector<1x1x128xf32>
    tpu.vector_store %arg4[%c0_22, %c1, %c0_23], %52 {strides = array<i32>} : memref<1x5x128xf32, #tpu.memory_space<vmem>>, vector<1x1x128xf32>,
    %c0_24 = arith.constant 0 : index
    %c1_25 = arith.constant 1 : index
    %c0_26 = arith.constant 0 : index
    %53 = vector.load %arg5[%c0_24, %c1_25, %c0_26] : memref<1x5x128xi32, #tpu.memory_space<vmem>>, vector<1x1x128xi32>
    %54 = vector.shape_cast %53 : vector<1x1x128xi32> to vector<1x128xi32>
    %55 = vector.shape_cast %45 : vector<1x128xi32> to vector<1x1x128xi32>
    tpu.vector_store %arg5[%c0_24, %c1_25, %c0_26], %55 {strides = array<i32>} : memref<1x5x128xi32, #tpu.memory_space<vmem>>, vector<1x1x128xi32>,
    %56 = vector.broadcast %45 : vector<1x128xi32> to vector<64x128xi32>
    %57 = arith.cmpi eq, %43, %56 : vector<64x128xi32>
    %cst_27 = arith.constant 0x7F800000 : f32
    %58 = vector.broadcast %cst_27 : f32 to vector<64x128xf32>
    %59 = arith.select %57, %58, %37 : vector<64x128xi1>, vector<64x128xf32>
    %cst_28 = arith.constant dense<0x7F800000> : vector<128xf32>
    %60 = vector.multi_reduction <minimumf>, %59, %cst_28 [0] : vector<64x128xf32> to vector<128xf32>
    %61 = vector.shape_cast %60 : vector<128xf32> to vector<1x128xf32>
    %62 = vector.broadcast %61 : vector<1x128xf32> to vector<64x128xf32>
    %63 = arith.cmpf oeq, %59, %62 : vector<64x128xf32>
    %c64_i32_29 = arith.constant 64 : i32
    %64 = vector.broadcast %c64_i32_29 : i32 to vector<64x128xi32>
    %65 = arith.select %63, %15, %64 : vector<64x128xi1>, vector<64x128xi32>
    %cst_30 = arith.constant dense<2147483647> : vector<128xi32>
    %66 = vector.multi_reduction <minsi>, %65, %cst_30 [0] : vector<64x128xi32> to vector<128xi32>
    %67 = vector.shape_cast %66 : vector<128xi32> to vector<1x128xi32>
    %68 = arith.addf %61, %9 : vector<1x128xf32>
    %cst_31 = arith.constant 0.000000e+00 : f32
    %69 = vector.broadcast %cst_31 : f32 to vector<1x128xf32>
    %70 = arith.maximumf %68, %69 : vector<1x128xf32>
    %71 = math.sqrt %70 : vector<1x128xf32>
    %c0_32 = arith.constant 0 : index
    %c2 = arith.constant 2 : index
    %c0_33 = arith.constant 0 : index
    %72 = vector.load %arg4[%c0_32, %c2, %c0_33] : memref<1x5x128xf32, #tpu.memory_space<vmem>>, vector<1x1x128xf32>
    %73 = vector.shape_cast %72 : vector<1x1x128xf32> to vector<1x128xf32>
    %74 = vector.shape_cast %71 : vector<1x128xf32> to vector<1x1x128xf32>
    tpu.vector_store %arg4[%c0_32, %c2, %c0_33], %74 {strides = array<i32>} : memref<1x5x128xf32, #tpu.memory_space<vmem>>, vector<1x1x128xf32>,
    %c0_34 = arith.constant 0 : index
    %c2_35 = arith.constant 2 : index
    %c0_36 = arith.constant 0 : index
    %75 = vector.load %arg5[%c0_34, %c2_35, %c0_36] : memref<1x5x128xi32, #tpu.memory_space<vmem>>, vector<1x1x128xi32>
    %76 = vector.shape_cast %75 : vector<1x1x128xi32> to vector<1x128xi32>
    %77 = vector.shape_cast %67 : vector<1x128xi32> to vector<1x1x128xi32>
    tpu.vector_store %arg5[%c0_34, %c2_35, %c0_36], %77 {strides = array<i32>} : memref<1x5x128xi32, #tpu.memory_space<vmem>>, vector<1x1x128xi32>,
    %78 = vector.broadcast %67 : vector<1x128xi32> to vector<64x128xi32>
    %79 = arith.cmpi eq, %65, %78 : vector<64x128xi32>
    %cst_37 = arith.constant 0x7F800000 : f32
    %80 = vector.broadcast %cst_37 : f32 to vector<64x128xf32>
    %81 = arith.select %79, %80, %59 : vector<64x128xi1>, vector<64x128xf32>
    %cst_38 = arith.constant dense<0x7F800000> : vector<128xf32>
    %82 = vector.multi_reduction <minimumf>, %81, %cst_38 [0] : vector<64x128xf32> to vector<128xf32>
    %83 = vector.shape_cast %82 : vector<128xf32> to vector<1x128xf32>
    %84 = vector.broadcast %83 : vector<1x128xf32> to vector<64x128xf32>
    %85 = arith.cmpf oeq, %81, %84 : vector<64x128xf32>
    %c64_i32_39 = arith.constant 64 : i32
    %86 = vector.broadcast %c64_i32_39 : i32 to vector<64x128xi32>
    %87 = arith.select %85, %15, %86 : vector<64x128xi1>, vector<64x128xi32>
    %cst_40 = arith.constant dense<2147483647> : vector<128xi32>
    %88 = vector.multi_reduction <minsi>, %87, %cst_40 [0] : vector<64x128xi32> to vector<128xi32>
    %89 = vector.shape_cast %88 : vector<128xi32> to vector<1x128xi32>
    %90 = arith.addf %83, %9 : vector<1x128xf32>
    %cst_41 = arith.constant 0.000000e+00 : f32
    %91 = vector.broadcast %cst_41 : f32 to vector<1x128xf32>
    %92 = arith.maximumf %90, %91 : vector<1x128xf32>
    %93 = math.sqrt %92 : vector<1x128xf32>
    %c0_42 = arith.constant 0 : index
    %c3 = arith.constant 3 : index
    %c0_43 = arith.constant 0 : index
    %94 = vector.load %arg4[%c0_42, %c3, %c0_43] : memref<1x5x128xf32, #tpu.memory_space<vmem>>, vector<1x1x128xf32>
    %95 = vector.shape_cast %94 : vector<1x1x128xf32> to vector<1x128xf32>
    %96 = vector.shape_cast %93 : vector<1x128xf32> to vector<1x1x128xf32>
    tpu.vector_store %arg4[%c0_42, %c3, %c0_43], %96 {strides = array<i32>} : memref<1x5x128xf32, #tpu.memory_space<vmem>>, vector<1x1x128xf32>,
    %c0_44 = arith.constant 0 : index
    %c3_45 = arith.constant 3 : index
    %c0_46 = arith.constant 0 : index
    %97 = vector.load %arg5[%c0_44, %c3_45, %c0_46] : memref<1x5x128xi32, #tpu.memory_space<vmem>>, vector<1x1x128xi32>
    %98 = vector.shape_cast %97 : vector<1x1x128xi32> to vector<1x128xi32>
    %99 = vector.shape_cast %89 : vector<1x128xi32> to vector<1x1x128xi32>
    tpu.vector_store %arg5[%c0_44, %c3_45, %c0_46], %99 {strides = array<i32>} : memref<1x5x128xi32, #tpu.memory_space<vmem>>, vector<1x1x128xi32>,
    %100 = vector.broadcast %89 : vector<1x128xi32> to vector<64x128xi32>
    %101 = arith.cmpi eq, %87, %100 : vector<64x128xi32>
    %cst_47 = arith.constant 0x7F800000 : f32
    %102 = vector.broadcast %cst_47 : f32 to vector<64x128xf32>
    %103 = arith.select %101, %102, %81 : vector<64x128xi1>, vector<64x128xf32>
    %cst_48 = arith.constant dense<0x7F800000> : vector<128xf32>
    %104 = vector.multi_reduction <minimumf>, %103, %cst_48 [0] : vector<64x128xf32> to vector<128xf32>
    %105 = vector.shape_cast %104 : vector<128xf32> to vector<1x128xf32>
    %106 = vector.broadcast %105 : vector<1x128xf32> to vector<64x128xf32>
    %107 = arith.cmpf oeq, %103, %106 : vector<64x128xf32>
    %c64_i32_49 = arith.constant 64 : i32
    %108 = vector.broadcast %c64_i32_49 : i32 to vector<64x128xi32>
    %109 = arith.select %107, %15, %108 : vector<64x128xi1>, vector<64x128xi32>
    %cst_50 = arith.constant dense<2147483647> : vector<128xi32>
    %110 = vector.multi_reduction <minsi>, %109, %cst_50 [0] : vector<64x128xi32> to vector<128xi32>
    %111 = vector.shape_cast %110 : vector<128xi32> to vector<1x128xi32>
    %112 = arith.addf %105, %9 : vector<1x128xf32>
    %cst_51 = arith.constant 0.000000e+00 : f32
    %113 = vector.broadcast %cst_51 : f32 to vector<1x128xf32>
    %114 = arith.maximumf %112, %113 : vector<1x128xf32>
    %115 = math.sqrt %114 : vector<1x128xf32>
    %c0_52 = arith.constant 0 : index
    %c4 = arith.constant 4 : index
    %c0_53 = arith.constant 0 : index
    %116 = vector.load %arg4[%c0_52, %c4, %c0_53] : memref<1x5x128xf32, #tpu.memory_space<vmem>>, vector<1x1x128xf32>
    %117 = vector.shape_cast %116 : vector<1x1x128xf32> to vector<1x128xf32>
    %118 = vector.shape_cast %115 : vector<1x128xf32> to vector<1x1x128xf32>
    tpu.vector_store %arg4[%c0_52, %c4, %c0_53], %118 {strides = array<i32>} : memref<1x5x128xf32, #tpu.memory_space<vmem>>, vector<1x1x128xf32>,
    %c0_54 = arith.constant 0 : index
    %c4_55 = arith.constant 4 : index
    %c0_56 = arith.constant 0 : index
    %119 = vector.load %arg5[%c0_54, %c4_55, %c0_56] : memref<1x5x128xi32, #tpu.memory_space<vmem>>, vector<1x1x128xi32>
    %120 = vector.shape_cast %119 : vector<1x1x128xi32> to vector<1x128xi32>
    %121 = vector.shape_cast %111 : vector<1x128xi32> to vector<1x1x128xi32>
    tpu.vector_store %arg5[%c0_54, %c4_55, %c0_56], %121 {strides = array<i32>} : memref<1x5x128xi32, #tpu.memory_space<vmem>>, vector<1x1x128xi32>,
    return
  }
  func.func @transform_0(%arg0: i32, %arg1: i32) -> (i32, i32, i32) {
    %c0_i32 = arith.constant 0 : i32
    %c0_i32_0 = arith.constant 0 : i32
    %c0_i32_1 = arith.constant 0 : i32
    return %arg0, %c0_i32, %c0_i32_0 : i32, i32, i32
  }
  func.func @transform_1(%arg0: i32, %arg1: i32) -> (i32, i32, i32) {
    %c0_i32 = arith.constant 0 : i32
    %c0_i32_0 = arith.constant 0 : i32
    return %arg0, %c0_i32, %arg1 : i32, i32, i32
  }
  func.func @transform_2(%arg0: i32, %arg1: i32) -> (i32, i32, i32) {
    %c0_i32 = arith.constant 0 : i32
    %c0_i32_0 = arith.constant 0 : i32
    return %arg0, %c0_i32, %arg1 : i32, i32, i32
  }
  func.func @transform_3(%arg0: i32, %arg1: i32) -> (i32, i32, i32) {
    %c0_i32 = arith.constant 0 : i32
    %c0_i32_0 = arith.constant 0 : i32
    return %arg0, %c0_i32, %arg1 : i32, i32, i32
  }
}

</mosaic_0001>

<llo_original>
// kernel: knn_pallas.1
$region0: #{knn_pallas.1}
  #allocation0 [shape = 'u32[]', space=smem, size = 0x4, offset = 0x4, fixed_abs, tag = 'smem constant byte address 0x4 - core index']
  #allocation1 [shape = 'u32[144,128]{1,0:T(1,128)}', space=vmem, size = 0x12000, scoped, tag = 'internal scratch']
  %s0 = inlined_call_operand.vmem [shape: f32[2,64,8], index: 0, kind: input, shape index: {}]
  %s1 = inlined_call_operand.vmem [shape: f32[2,8,128], index: 1, kind: input, shape index: {}]
  %s2 = inlined_call_operand.vmem [shape: f32[2,5,128], index: 2, kind: output, shape index: {0}]
  %s3 = inlined_call_operand.vmem [shape: s32[2,5,128], index: 3, kind: output, shape index: {1}]
  %4 = xla_tuple %s2, %s3
  %s5 = sld [smem:[#allocation0]]
  $region49: #{knn_pallas.1} parent=0
    _
  %s7 = ssub.s32 1, %s5
  %s8 = scalar_select 0, %s7, %s5
  loop: start=0, step=1, limit=4
  $region2: #{knn_pallas.1} parent=0 // loop_pre_header
    _
  $region3: #{knn_pallas.1} parent=0 // loop_header
    %s10 = sphi 0, %s14
    %p11 = scmp.ge.s32.totalorder %s10, 4
    %s17 = sphi 0, %s29
    %s18 = sphi 0, %s25
    %s19 = sphi 0, %s17
    %s20 = sphi 0, %s18
    %s21 = sphi 0, %s19
    %s22 = sphi 0, %s20
    %s32 = sphi 0, %s34
    %s35 = sphi 0, %s32
    %s36 = sphi 0, %s35
    %s52 = sphi 0, %s36
    %s60 = sphi 0, %s62
    %s63 = sphi 0, %s60
    %s64 = sphi 0, %s63
    %s80 = sphi 0, %s64
    %s88 = sphi 0, %s90
    %s91 = sphi 0, %s88
    %s92 = sphi 0, %s91
    %s108 = sphi 0, %s92
    %s116 = sphi 0, %s118
    %s119 = sphi 0, %s116
    %s120 = sphi 0, %s119
    %s136 = sphi 0, %s120
  $region4: #{knn_pallas.1} parent=0 // loop_header_branch
    %13 = sbr.rel (%p11) target = $region8
  $region5: #{knn_pallas.1} parent=0 // loop_body
    %s15 = ssub.s32 %s10, 1
    %s16 = ssub.s32 %s10, 2
    %s23 = sadd.s32 1, %s18
    %p24 = scmp.ge.s32.totalorder %s23, 1
    %s25 = scalar_select %p24, 0, %s23
    %s26 = sadd.s32 1, %s17
    %s27 = scalar_select %p24, %s26, %s17
    %p28 = scmp.ge.s32.totalorder %s27, 2
    %s29 = scalar_select %p28, 0, %s27
    %s30 = ssub.s32 %s17, %s29
    %p31 = scmp.eq.s32.totalorder %s30, 0
    %s33 = sadd.s32 %s32, 1
    %s34 = scalar_select %p31, %s32, %s33
    %p37 = pneg %p31
    %p38 = scmp.eq.s32.totalorder %s10, 1
    %p39 = por %p37, %p38
    %p40 = scmp.ne.s32.totalorder %s32, %s35
    %p41 = scmp.eq.s32.totalorder %s10, 0
    %p42 = por %p40, %p41
    %p43 = scmp.ne.s32.totalorder %s32, %s35
    %p44 = scmp.eq.s32.totalorder %s15, 1
    %p45 = por %p43, %p44
    %p46 = scmp.ne.s32.totalorder %s35, %s36
    %p47 = scmp.eq.s32.totalorder %s15, 0
    %p48 = por %p46, %p47
    %p49 = scmp.ne.s32.totalorder %s35, %s36
    %p50 = scmp.eq.s32.totalorder %s16, 1
    %p51 = por %p49, %p50
    %p53 = scmp.ne.s32.totalorder %s36, %s52
    %p54 = scmp.eq.s32.totalorder %s16, 0
    %p55 = por %p53, %p54
    %s56 = ssub.s32 %s17, %s29
    %s57 = ssub.s32 %s18, %s25
    %s58 = sor.u32 %s56, %s57
    %p59 = scmp.eq.s32.totalorder %s58, 0
    %s61 = sadd.s32 %s60, 1
    %s62 = scalar_select %p59, %s60, %s61
    %p65 = pneg %p59
    %p66 = scmp.eq.s32.totalorder %s10, 1
    %p67 = por %p65, %p66
    %p68 = scmp.ne.s32.totalorder %s60, %s63
    %p69 = scmp.eq.s32.totalorder %s10, 0
    %p70 = por %p68, %p69
    %p71 = scmp.ne.s32.totalorder %s60, %s63
    %p72 = scmp.eq.s32.totalorder %s15, 1
    %p73 = por %p71, %p72
    %p74 = scmp.ne.s32.totalorder %s63, %s64
    %p75 = scmp.eq.s32.totalorder %s15, 0
    %p76 = por %p74, %p75
    %p77 = scmp.ne.s32.totalorder %s63, %s64
    %p78 = scmp.eq.s32.totalorder %s16, 1
    %p79 = por %p77, %p78
    %p81 = scmp.ne.s32.totalorder %s64, %s80
    %p82 = scmp.eq.s32.totalorder %s16, 0
    %p83 = por %p81, %p82
    %s84 = ssub.s32 %s17, %s29
    %s85 = ssub.s32 %s18, %s25
    %s86 = sor.u32 %s84, %s85
    %p87 = scmp.eq.s32.totalorder %s86, 0
    %s89 = sadd.s32 %s88, 1
    %s90 = scalar_select %p87, %s88, %s89
    %p93 = pneg %p87
    %p94 = scmp.eq.s32.totalorder %s10, 1
    %p95 = por %p93, %p94
    %p96 = scmp.ne.s32.totalorder %s88, %s91
    %p97 = scmp.eq.s32.totalorder %s10, 0
    %p98 = por %p96, %p97
    %p99 = scmp.ne.s32.totalorder %s88, %s91
    %p100 = scmp.eq.s32.totalorder %s15, 1
    %p101 = por %p99, %p100
    %p102 = scmp.ne.s32.totalorder %s91, %s92
    %p103 = scmp.eq.s32.totalorder %s15, 0
    %p104 = por %p102, %p103
    %p105 = scmp.ne.s32.totalorder %s91, %s92
    %p106 = scmp.eq.s32.totalorder %s16, 1
    %p107 = por %p105, %p106
    %p109 = scmp.ne.s32.totalorder %s92, %s108
    %p110 = scmp.eq.s32.totalorder %s16, 0
    %p111 = por %p109, %p110
    %s112 = ssub.s32 %s17, %s29
    %s113 = ssub.s32 %s18, %s25
    %s114 = sor.u32 %s112, %s113
    %p115 = scmp.eq.s32.totalorder %s114, 0
    %s117 = sadd.s32 %s116, 1
    %s118 = scalar_select %p115, %s116, %s117
    %p121 = pneg %p115
    %p122 = scmp.eq.s32.totalorder %s10, 1
    %p123 = por %p121, %p122
    %p124 = scmp.ne.s32.totalorder %s116, %s119
    %p125 = scmp.eq.s32.totalorder %s10, 0
    %p126 = por %p124, %p125
    %p127 = scmp.ne.s32.totalorder %s116, %s119
    %p128 = scmp.eq.s32.totalorder %s15, 1
    %p129 = por %p127, %p128
    %p130 = scmp.ne.s32.totalorder %s119, %s120
    %p131 = scmp.eq.s32.totalorder %s15, 0
    %p132 = por %p130, %p131
    %p133 = scmp.ne.s32.totalorder %s119, %s120
    %p134 = scmp.eq.s32.totalorder %s16, 1
    %p135 = por %p133, %p134
    %p137 = scmp.ne.s32.totalorder %s120, %s136
    %p138 = scmp.eq.s32.totalorder %s16, 0
    %p139 = por %p137, %p138
    %p140 = scmp.le.s32.totalorder 1, %s10
    %p141 = scmp.lt.s32.totalorder %s10, 3
    %p142 = pnand %p140, %p141
    %p143 = pneg %p142
    // Predicated region
    $region9: #{knn_pallas.1} parent=5 // pred_check
      _
    $region10: #{knn_pallas.1} parent=5 // pred_check_branch
      %145 = sbr.rel (%p142) target = $region12
    $region11: #{knn_pallas.1} parent=5 // pred_region
      %s146 = ssub.s32 %s10, 1
    $region12: #{knn_pallas.1} parent=5 // pred_fallthru
      _
    %p147 = scmp.lt.s32.totalorder %s10, 2
    // Predicated region
    $region13: #{knn_pallas.1} parent=5 // pred_check
      %p148 = pneg %p147
    $region14: #{knn_pallas.1} parent=5 // pred_check_branch
      %150 = sbr.rel (%p148) target = $region16
    $region15: #{knn_pallas.1} parent=5 // pred_region
      // Predicated region
      $region17: #{knn_pallas.1} parent=15 // pred_check
        %p151 = pneg %p42
      $region18: #{knn_pallas.1} parent=15 // pred_check_branch
        %153 = sbr.rel (%p151) target = $region20
      $region19: #{knn_pallas.1} parent=15 // pred_region
        %p154 = scmp.lt.s32.totalorder %s17, 1
        %s155 = scalar_select %p154, %s17, 1
        %s156 = smul.addr %s155, 8
        %s157 = smul.addr %s156, 8
        %s158 = scalar_lea.vmem %s0, %s157
      $region20: #{knn_pallas.1} parent=15 // pred_fallthru
        _
      // Predicated region
      $region21: #{knn_pallas.1} parent=15 // pred_check
        %p159 = pneg %p70
      $region22: #{knn_pallas.1} parent=15 // pred_check_branch
        %161 = sbr.rel (%p159) target = $region24
      $region23: #{knn_pallas.1} parent=15 // pred_region
        %p162 = scmp.lt.s32.totalorder %s17, 1
        %s163 = scalar_select %p162, %s17, 1
        %p164 = scmp.lt.s32.totalorder %s18, 0
        %s165 = scalar_select %p164, %s18, 0
        %s166 = sadd.s32 %s165, %s163
        %s167 = smul.addr %s166, 8
        %s168 = scalar_lea.vmem %s1, %s167
      $region24: #{knn_pallas.1} parent=15 // pred_fallthru
        _
    $region16: #{knn_pallas.1} parent=5 // pred_fallthru
      _
    %p169 = scmp.le.s32.totalorder 1, %s10
    %p170 = scmp.lt.s32.totalorder %s10, 3
    %p171 = pnand %p169, %p170
    %p172 = pneg %p171
    // Predicated region
    $region25: #{knn_pallas.1} parent=5 // pred_check
      _
    $region26: #{knn_pallas.1} parent=5 // pred_check_branch
      %174 = sbr.rel (%p171) target = $region28
    $region27: #{knn_pallas.1} parent=5 // pred_region
      %s175 = ssub.s32 %s10, 1
      %p176 = scmp.lt.s32.totalorder %s19, 1
      %s177 = scalar_select %p176, %s19, 1
      %s178 = smul.addr %s177, 8
      %s179 = smul.addr %s178, 8
      %s180 = scalar_lea.vmem %s0, %s179
      %p181 = pneg %p48
      %p182 = pneg %p45
      %p183 = scmp.lt.s32.totalorder %s19, 1
      %s184 = scalar_select %p183, %s19, 1
      %p185 = scmp.lt.s32.totalorder %s20, 0
      %s186 = scalar_select %p185, %s20, 0
      %s187 = sadd.s32 %s186, %s184
      %s188 = smul.addr %s187, 8
      %s189 = scalar_lea.vmem %s1, %s188
      %p190 = pneg %p76
      %p191 = pneg %p73
      %p192 = pneg %p104
      %p193 = pneg %p101
      %p194 = scmp.lt.s32.totalorder %s19, 1
      %s195 = scalar_select %p194, %s19, 1
      %p196 = scmp.lt.s32.totalorder %s20, 0
      %s197 = scalar_select %p196, %s20, 0
      %s198 = sadd.s32 %s197, %s195
      %s199 = smul.addr %s198, 8
      %s200 = scalar_lea.vmem %s2, %s199
      %p201 = pneg %p132
      %p202 = pneg %p129
      %p203 = scmp.lt.s32.totalorder %s19, 1
      %s204 = scalar_select %p203, %s19, 1
      %p205 = scmp.lt.s32.totalorder %s20, 0
      %s206 = scalar_select %p205, %s20, 0
      %s207 = sadd.s32 %s206, %s204
      %s208 = smul.addr %s207, 8
      %s209 = scalar_lea.vmem %s3, %s208
      %p210 = scmp.lt.s32.totalorder %s19, 1
      %s211 = scalar_select %p210, %s19, 1
      %s212 = smul.addr %s211, 8
      %s213 = smul.addr %s212, 8
      %s214 = scalar_lea.vmem %s0, %s213
      %p215 = scmp.lt.s32.totalorder %s19, 1
      %s216 = scalar_select %p215, %s19, 1
      %p217 = scmp.lt.s32.totalorder %s20, 0
      %s218 = scalar_select %p217, %s20, 0
      %s219 = sadd.s32 %s218, %s216
      %s220 = smul.addr %s219, 8
      %s221 = scalar_lea.vmem %s1, %s220
      %p222 = scmp.lt.s32.totalorder %s19, 1
      %s223 = scalar_select %p222, %s19, 1
      %p224 = scmp.lt.s32.totalorder %s20, 0
      %s225 = scalar_select %p224, %s20, 0
      %s226 = sadd.s32 %s225, %s223
      %s227 = smul.addr %s226, 8
      %s228 = scalar_lea.vmem %s2, %s227
      %p229 = scmp.lt.s32.totalorder %s19, 1
      %s230 = scalar_select %p229, %s19, 1
      %p231 = scmp.lt.s32.totalorder %s20, 0
      %s232 = scalar_select %p231, %s20, 0
      %s233 = sadd.s32 %s232, %s230
      %s234 = smul.addr %s233, 8
      %s235 = scalar_lea.vmem %s3, %s234
      %v236 = vld [vmem:[%s214] sm:$0xff]
      %v237 = vld [vmem:[%s214 + $0x8] sm:$0xff]
      %v238 = vld [vmem:[%s214 + $0x10] sm:$0xff]
      %v239 = vld [vmem:[%s214 + $0x18] sm:$0xff]
      %v240 = vld [vmem:[%s214 + $0x20] sm:$0xff]
      %v241 = vld [vmem:[%s214 + $0x28] sm:$0xff]
      %v242 = vld [vmem:[%s214 + $0x30] sm:$0xff]
      %v243 = vld [vmem:[%s214 + $0x38] sm:$0xff]
      %v244 = vld [vmem:[%s221] sm:$0xff]
      %v245 = vmul.f32 %v236, %v236
      %v246 = vmul.f32 %v237, %v237
      %v247 = vmul.f32 %v238, %v238
      %v248 = vmul.f32 %v239, %v239
      %v249 = vmul.f32 %v240, %v240
      %v250 = vmul.f32 %v241, %v241
      %v251 = vmul.f32 %v242, %v242
      %v252 = vmul.f32 %v243, %v243
      %vm253 = vcmask 64512
      %v254 = vsel %vm253, %v245, 0.0
      %255 = vadd.xlane.f32.xlu0 %v254
      %v256 = vpop.xlane.xlu0 %255
      %v257 = vsel %vm253, %v246, 0.0
      %258 = vadd.xlane.f32.xlu0 %v257
      %v259 = vpop.xlane.xlu0 %258
      %v260 = vsel %vm253, %v247, 0.0
      %261 = vadd.xlane.f32.xlu0 %v260
      %v262 = vpop.xlane.xlu0 %261
      %v263 = vsel %vm253, %v248, 0.0
      %264 = vadd.xlane.f32.xlu0 %v263
      %v265 = vpop.xlane.xlu0 %264
      %v266 = vsel %vm253, %v249, 0.0
      %267 = vadd.xlane.f32.xlu0 %v266
      %v268 = vpop.xlane.xlu0 %267
      %v269 = vsel %vm253, %v250, 0.0
      %270 = vadd.xlane.f32.xlu0 %v269
      %v271 = vpop.xlane.xlu0 %270
      %v272 = vsel %vm253, %v251, 0.0
      %273 = vadd.xlane.f32.xlu0 %v272
      %v274 = vpop.xlane.xlu0 %273
      %v275 = vsel %vm253, %v252, 0.0
      %276 = vadd.xlane.f32.xlu0 %v275
      %v277 = vpop.xlane.xlu0 %276
      %v278 = vmul.f32 %v244, %v244
      %v279 = vrot.slane %v278, 4
      %v280 = vadd.f32 %v278, %v279
      %v281 = vrot.slane %v280, 2
      %v282 = vadd.f32 %v280, %v281
      %v283 = vrot.slane %v282, 1
      %v284 = vadd.f32 %v282, %v283
      %v286 = vsel %vm253, %v236, 0
      %v289 = vsel %vm253, %v237, 0
      %v292 = vsel %vm253, %v238, 0
      %v295 = vsel %vm253, %v239, 0
      %v298 = vsel %vm253, %v240, 0
      %v301 = vsel %vm253, %v241, 0
      %v304 = vsel %vm253, %v242, 0
      %v307 = vsel %vm253, %v243, 0
      %309 = vmatprep.subr.mxu0 0.0
      %v310 = vand.u32 %v244, 4294901760
      %311 = vmatpush1.msra.mxu0 %v310
      %312 = vmatprep.subr.mxu0 0.0
      %313 = vmatpush1.msra.mxu0 0.0
      %314 = vmatprep.subr.mxu0 0.0
      %315 = vmatpush1.msra.mxu0 0.0
      %316 = vmatprep.subr.mxu0 0.0
      %317 = vmatpush1.msra.mxu0 0.0
      %318 = vmatprep.subr.mxu0 0.0
      %319 = vmatpush1.msra.mxu0 0.0
      %320 = vmatprep.subr.mxu0 0.0
      %321 = vmatpush1.msra.mxu0 0.0
      %322 = vmatprep.subr.mxu0 0.0
      %323 = vmatpush1.msra.mxu0 0.0
      %324 = vmatprep.subr.mxu0 0.0
      %325 = vmatpush1.msra.mxu0 0.0
      %326 = vmatprep.subr.mxu0 0.0
      %327 = vmatpush1.msra.mxu0 0.0
      %328 = vmatprep.subr.mxu0 0.0
      %329 = vmatpush1.msra.mxu0 0.0
      %330 = vmatprep.subr.mxu0 0.0
      %331 = vmatpush1.msra.mxu0 0.0
      %332 = vmatprep.subr.mxu0 0.0
      %333 = vmatpush1.msra.mxu0 0.0
      %334 = vmatprep.subr.mxu0 0.0
      %335 = vmatpush1.msra.mxu0 0.0
      %336 = vmatprep.subr.mxu0 0.0
      %337 = vmatpush1.msra.mxu0 0.0
      %338 = vmatprep.subr.mxu0 0.0
      %339 = vmatpush1.msra.mxu0 0.0
      %340 = vmatprep.subr.mxu0 0.0
      %341 = vmatpush1.msra.mxu0 0.0
      %342 = vmatprep.subr.mxu0 0.0
      %343 = vmatpush1.msra.mxu0 0.0
      %344 = vmatprep.subr.mxu0 0.0
      %345 = vmatpush1.msra.mxu0 0.0
      %346 = vmatprep.subr.mxu0 0.0
      %347 = vmatpush1.msra.mxu0 0.0
      %348 = vmatprep.subr.mxu0 0.0
      %349 = vmatpush1.msra.mxu0 0.0
      %350 = vmatprep.subr.mxu0 0.0
      %351 = vmatpush1.msra.mxu0 0.0
      %352 = vmatprep.subr.mxu0 0.0
      %353 = vmatpush1.msra.mxu0 0.0
      %354 = vmatprep.subr.mxu0 0.0
      %355 = vmatpush1.msra.mxu0 0.0
      %356 = vmatprep.subr.mxu0 0.0
      %357 = vmatpush1.msra.mxu0 0.0
      %358 = vmatprep.subr.mxu0 0.0
      %359 = vmatpush1.msra.mxu0 0.0
      %360 = vmatprep.subr.mxu0 0.0
      %361 = vmatpush1.msra.mxu0 0.0
      %362 = vmatprep.subr.mxu0 0.0
      %363 = vmatpush1.msra.mxu0 0.0
      %364 = vmatprep.subr.mxu0 0.0
      %365 = vmatpush1.msra.mxu0 0.0
      %366 = vmatprep.subr.mxu0 0.0
      %367 = vmatpush1.msra.mxu0 0.0
      %368 = vmatprep.subr.mxu0 0.0
      %369 = vmatpush1.msra.mxu0 0.0
      %370 = vmatprep.subr.mxu0 0.0
      %371 = vmatpush1.msra.mxu0 0.0
      %372 = vmatprep.subr.mxu0 0.0
      %373 = vmatpush1.msra.mxu0 0.0
      %374 = vmatprep.mubr.f32.mxu0 0.0
      %v375 = vand.u32 %v286, 4294901760
      %v376 = vsub.f32 %v286, %v375
      %v377 = vand.u32 %v376, 4294901760
      %v378 = vsub.f32 %v376, %v377
      %v379 = vand.u32 %v378, 4294901760
      %380 = vmatmul.mubr.f32.gmra.mrb[0].mxu0 %v379
      %v381 = vpop.f32.mrb[0].mxu0
      %v382 = vadd.f32 0.0, %v381
      %v383 = vpop.f32.mrb[0].mxu0
      %384 = vmatprep.mubr.f32.mxu0 0.0
      %v385 = vand.u32 %v289, 4294901760
      %v386 = vsub.f32 %v289, %v385
      %v387 = vand.u32 %v386, 4294901760
      %v388 = vsub.f32 %v386, %v387
      %v389 = vand.u32 %v388, 4294901760
      %390 = vmatmul.mubr.f32.gmra.mrb[0].mxu0 %v389
      %v391 = vpop.f32.mrb[0].mxu0
      %v392 = vadd.f32 0.0, %v391
      %v393 = vpop.f32.mrb[0].mxu0
      %394 = vmatprep.mubr.f32.mxu0 0.0
      %v395 = vand.u32 %v292, 4294901760
      %v396 = vsub.f32 %v292, %v395
      %v397 = vand.u32 %v396, 4294901760
      %v398 = vsub.f32 %v396, %v397
      %v399 = vand.u32 %v398, 4294901760
      %400 = vmatmul.mubr.f32.gmra.mrb[0].mxu0 %v399
      %v401 = vpop.f32.mrb[0].mxu0
      %v402 = vadd.f32 0.0, %v401
      %v403 = vpop.f32.mrb[0].mxu0
      %404 = vmatprep.mubr.f32.mxu0 0.0
      %v405 = vand.u32 %v295, 4294901760
      %v406 = vsub.f32 %v295, %v405
      %v407 = vand.u32 %v406, 4294901760
      %v408 = vsub.f32 %v406, %v407
      %v409 = vand.u32 %v408, 4294901760
      %410 = vmatmul.mubr.f32.gmra.mrb[0].mxu0 %v409
      %v411 = vpop.f32.mrb[0].mxu0
      %v412 = vadd.f32 0.0, %v411
      %v413 = vpop.f32.mrb[0].mxu0
      %414 = vmatprep.mubr.f32.mxu0 0.0
      %v415 = vand.u32 %v298, 4294901760
      %v416 = vsub.f32 %v298, %v415
      %v417 = vand.u32 %v416, 4294901760
      %v418 = vsub.f32 %v416, %v417
      %v419 = vand.u32 %v418, 4294901760
      %420 = vmatmul.mubr.f32.gmra.mrb[0].mxu0 %v419
      %v421 = vpop.f32.mrb[0].mxu0
      %v422 = vadd.f32 0.0, %v421
      %v423 = vpop.f32.mrb[0].mxu0
      %424 = vmatprep.mubr.f32.mxu0 0.0
      %v425 = vand.u32 %v301, 4294901760
      %v426 = vsub.f32 %v301, %v425
      %v427 = vand.u32 %v426, 4294901760
      %v428 = vsub.f32 %v426, %v427
      %v429 = vand.u32 %v428, 4294901760
      %430 = vmatmul.mubr.f32.gmra.mrb[0].mxu0 %v429
      %v431 = vpop.f32.mrb[0].mxu0
      %v432 = vadd.f32 0.0, %v431
      %v433 = vpop.f32.mrb[0].mxu0
      %434 = vmatprep.mubr.f32.mxu0 0.0
      %v435 = vand.u32 %v304, 4294901760
      %v436 = vsub.f32 %v304, %v435
      %v437 = vand.u32 %v436, 4294901760
      %v438 = vsub.f32 %v436, %v437
      %v439 = vand.u32 %v438, 4294901760
      %440 = vmatmul.mubr.f32.gmra.mrb[0].mxu0 %v439
      %v441 = vpop.f32.mrb[0].mxu0
      %v442 = vadd.f32 0.0, %v441
      %v443 = vpop.f32.mrb[0].mxu0
      %444 = vmatprep.mubr.f32.mxu0 0.0
      %v445 = vand.u32 %v307, 4294901760
      %v446 = vsub.f32 %v307, %v445
      %v447 = vand.u32 %v446, 4294901760
      %v448 = vsub.f32 %v446, %v447
      %v449 = vand.u32 %v448, 4294901760
      %450 = vmatmul.mubr.f32.gmra.mrb[0].mxu0 %v449
      %v451 = vpop.f32.mrb[0].mxu0
      %v452 = vadd.f32 0.0, %v451
      %v453 = vpop.f32.mrb[0].mxu0
      %454 = vdwg.mxu0
      %455 = vmatprep.subr.mxu0 0.0
      %v456 = vand.u32 %v244, 4294901760
      %v457 = vsub.f32 %v244, %v456
      %v458 = vand.u32 %v457, 4294901760
      %v459 = vsub.f32 %v457, %v458
      %v460 = vand.u32 %v459, 4294901760
      %461 = vmatpush1.msra.mxu0 %v460
      %462 = vmatprep.subr.mxu0 0.0
      %463 = vmatpush1.msra.mxu0 0.0
      %464 = vmatprep.subr.mxu0 0.0
      %465 = vmatpush1.msra.mxu0 0.0
      %466 = vmatprep.subr.mxu0 0.0
      %467 = vmatpush1.msra.mxu0 0.0
      %468 = vmatprep.subr.mxu0 0.0
      %469 = vmatpush1.msra.mxu0 0.0
      %470 = vmatprep.subr.mxu0 0.0
      %471 = vmatpush1.msra.mxu0 0.0
      %472 = vmatprep.subr.mxu0 0.0
      %473 = vmatpush1.msra.mxu0 0.0
      %474 = vmatprep.subr.mxu0 0.0
      %475 = vmatpush1.msra.mxu0 0.0
      %476 = vmatprep.subr.mxu0 0.0
      %477 = vmatpush1.msra.mxu0 0.0
      %478 = vmatprep.subr.mxu0 0.0
      %479 = vmatpush1.msra.mxu0 0.0
      %480 = vmatprep.subr.mxu0 0.0
      %481 = vmatpush1.msra.mxu0 0.0
      %482 = vmatprep.subr.mxu0 0.0
      %483 = vmatpush1.msra.mxu0 0.0
      %484 = vmatprep.subr.mxu0 0.0
      %485 = vmatpush1.msra.mxu0 0.0
      %486 = vmatprep.subr.mxu0 0.0
      %487 = vmatpush1.msra.mxu0 0.0
      %488 = vmatprep.subr.mxu0 0.0
      %489 = vmatpush1.msra.mxu0 0.0
      %490 = vmatprep.subr.mxu0 0.0
      %491 = vmatpush1.msra.mxu0 0.0
      %492 = vmatprep.subr.mxu0 0.0
      %493 = vmatpush1.msra.mxu0 0.0
      %494 = vmatprep.subr.mxu0 0.0
      %495 = vmatpush1.msra.mxu0 0.0
      %496 = vmatprep.subr.mxu0 0.0
      %497 = vmatpush1.msra.mxu0 0.0
      %498 = vmatprep.subr.mxu0 0.0
      %499 = vmatpush1.msra.mxu0 0.0
      %500 = vmatprep.subr.mxu0 0.0
      %501 = vmatpush1.msra.mxu0 0.0
      %502 = vmatprep.subr.mxu0 0.0
      %503 = vmatpush1.msra.mxu0 0.0
      %504 = vmatprep.subr.mxu0 0.0
      %505 = vmatpush1.msra.mxu0 0.0
      %506 = vmatprep.subr.mxu0 0.0
      %507 = vmatpush1.msra.mxu0 0.0
      %508 = vmatprep.subr.mxu0 0.0
      %509 = vmatpush1.msra.mxu0 0.0
      %510 = vmatprep.subr.mxu0 0.0
      %511 = vmatpush1.msra.mxu0 0.0
      %512 = vmatprep.subr.mxu0 0.0
      %513 = vmatpush1.msra.mxu0 0.0
      %514 = vmatprep.subr.mxu0 0.0
      %515 = vmatpush1.msra.mxu0 0.0
      %516 = vmatprep.subr.mxu0 0.0
      %517 = vmatpush1.msra.mxu0 0.0
      %518 = vmatprep.subr.mxu0 0.0
      %519 = vmatpush1.msra.mxu0 0.0
      %520 = vmatprep.subr.mxu0 0.0
      %521 = vmatpush1.msra.mxu0 0.0
      %522 = vmatprep.subr.mxu0 0.0
      %523 = vmatpush1.msra.mxu0 0.0
      %524 = vmatprep.mubr.f32.mxu0 0.0
      %v525 = vand.u32 %v286, 4294901760
      %526 = vmatmul.mubr.f32.gmra.mrb[0].mxu0 %v525
      %v527 = vpop.f32.mrb[0].mxu0
      %v528 = vadd.f32 %v382, %v527
      %v529 = vpop.f32.mrb[0].mxu0
      %530 = vmatprep.mubr.f32.mxu0 0.0
      %v531 = vand.u32 %v289, 4294901760
      %532 = vmatmul.mubr.f32.gmra.mrb[0].mxu0 %v531
      %v533 = vpop.f32.mrb[0].mxu0
      %v534 = vadd.f32 %v392, %v533
      %v535 = vpop.f32.mrb[0].mxu0
      %536 = vmatprep.mubr.f32.mxu0 0.0
      %v537 = vand.u32 %v292, 4294901760
      %538 = vmatmul.mubr.f32.gmra.mrb[0].mxu0 %v537
      %v539 = vpop.f32.mrb[0].mxu0
      %v540 = vadd.f32 %v402, %v539
      %v541 = vpop.f32.mrb[0].mxu0
      %542 = vmatprep.mubr.f32.mxu0 0.0
      %v543 = vand.u32 %v295, 4294901760
      %544 = vmatmul.mubr.f32.gmra.mrb[0].mxu0 %v543
      %v545 = vpop.f32.mrb[0].mxu0
      %v546 = vadd.f32 %v412, %v545
      %v547 = vpop.f32.mrb[0].mxu0
      %548 = vmatprep.mubr.f32.mxu0 0.0
      %v549 = vand.u32 %v298, 4294901760
      %550 = vmatmul.mubr.f32.gmra.mrb[0].mxu0 %v549
      %v551 = vpop.f32.mrb[0].mxu0
      %v552 = vadd.f32 %v422, %v551
      %v553 = vpop.f32.mrb[0].mxu0
      %554 = vmatprep.mubr.f32.mxu0 0.0
      %v555 = vand.u32 %v301, 4294901760
      %556 = vmatmul.mubr.f32.gmra.mrb[0].mxu0 %v555
      %v557 = vpop.f32.mrb[0].mxu0
      %v558 = vadd.f32 %v432, %v557
      %v559 = vpop.f32.mrb[0].mxu0
      %560 = vmatprep.mubr.f32.mxu0 0.0
      %v561 = vand.u32 %v304, 4294901760
      %562 = vmatmul.mubr.f32.gmra.mrb[0].mxu0 %v561
      %v563 = vpop.f32.mrb[0].mxu0
      %v564 = vadd.f32 %v442, %v563
      %v565 = vpop.f32.mrb[0].mxu0
      %566 = vmatprep.mubr.f32.mxu0 0.0
      %v567 = vand.u32 %v307, 4294901760
      %568 = vmatmul.mubr.f32.gmra.mrb[0].mxu0 %v567
      %v569 = vpop.f32.mrb[0].mxu0
      %v570 = vadd.f32 %v452, %v569
      %v571 = vpop.f32.mrb[0].mxu0
      %572 = vdwg.mxu0
      %573 = vmatprep.subr.mxu0 0.0
      %v574 = vand.u32 %v244, 4294901760
      %v575 = vsub.f32 %v244, %v574
      %576 = vmatpush1.msra.mxu0 %v575
      %577 = vmatprep.subr.mxu0 0.0
      %578 = vmatpush1.msra.mxu0 0.0
      %579 = vmatprep.subr.mxu0 0.0
      %580 = vmatpush1.msra.mxu0 0.0
      %581 = vmatprep.subr.mxu0 0.0
      %582 = vmatpush1.msra.mxu0 0.0
      %583 = vmatprep.subr.mxu0 0.0
      %584 = vmatpush1.msra.mxu0 0.0
      %585 = vmatprep.subr.mxu0 0.0
      %586 = vmatpush1.msra.mxu0 0.0
      %587 = vmatprep.subr.mxu0 0.0
      %588 = vmatpush1.msra.mxu0 0.0
      %589 = vmatprep.subr.mxu0 0.0
      %590 = vmatpush1.msra.mxu0 0.0
      %591 = vmatprep.subr.mxu0 0.0
      %592 = vmatpush1.msra.mxu0 0.0
      %593 = vmatprep.subr.mxu0 0.0
      %594 = vmatpush1.msra.mxu0 0.0
      %595 = vmatprep.subr.mxu0 0.0
      %596 = vmatpush1.msra.mxu0 0.0
      %597 = vmatprep.subr.mxu0 0.0
      %598 = vmatpush1.msra.mxu0 0.0
      %599 = vmatprep.subr.mxu0 0.0
      %600 = vmatpush1.msra.mxu0 0.0
      %601 = vmatprep.subr.mxu0 0.0
      %602 = vmatpush1.msra.mxu0 0.0
      %603 = vmatprep.subr.mxu0 0.0
      %604 = vmatpush1.msra.mxu0 0.0
      %605 = vmatprep.subr.mxu0 0.0
      %606 = vmatpush1.msra.mxu0 0.0
      %607 = vmatprep.subr.mxu0 0.0
      %608 = vmatpush1.msra.mxu0 0.0
      %609 = vmatprep.subr.mxu0 0.0
      %610 = vmatpush1.msra.mxu0 0.0
      %611 = vmatprep.subr.mxu0 0.0
      %612 = vmatpush1.msra.mxu0 0.0
      %613 = vmatprep.subr.mxu0 0.0
      %614 = vmatpush1.msra.mxu0 0.0
      %615 = vmatprep.subr.mxu0 0.0
      %616 = vmatpush1.msra.mxu0 0.0
      %617 = vmatprep.subr.mxu0 0.0
      %618 = vmatpush1.msra.mxu0 0.0
      %619 = vmatprep.subr.mxu0 0.0
      %620 = vmatpush1.msra.mxu0 0.0
      %621 = vmatprep.subr.mxu0 0.0
      %622 = vmatpush1.msra.mxu0 0.0
      %623 = vmatprep.subr.mxu0 0.0
      %624 = vmatpush1.msra.mxu0 0.0
      %625 = vmatprep.subr.mxu0 0.0
      %626 = vmatpush1.msra.mxu0 0.0
      %627 = vmatprep.subr.mxu0 0.0
      %628 = vmatpush1.msra.mxu0 0.0
      %629 = vmatprep.subr.mxu0 0.0
      %630 = vmatpush1.msra.mxu0 0.0
      %631 = vmatprep.subr.mxu0 0.0
      %632 = vmatpush1.msra.mxu0 0.0
      %633 = vmatprep.subr.mxu0 0.0
      %634 = vmatpush1.msra.mxu0 0.0
      %635 = vmatprep.subr.mxu0 0.0
      %636 = vmatpush1.msra.mxu0 0.0
      %637 = vmatprep.subr.mxu0 0.0
      %638 = vmatpush1.msra.mxu0 0.0
      %639 = vmatprep.mubr.f32.mxu0 0.0
      %v640 = vand.u32 %v286, 4294901760
      %v641 = vsub.f32 %v286, %v640
      %642 = vmatmul.mubr.f32.gmra.mrb[0].mxu0 %v641
      %v643 = vpop.f32.mrb[0].mxu0
      %v644 = vadd.f32 %v528, %v643
      %v645 = vpop.f32.mrb[0].mxu0
      %646 = vmatprep.mubr.f32.mxu0 0.0
      %v647 = vand.u32 %v289, 4294901760
      %v648 = vsub.f32 %v289, %v647
      %649 = vmatmul.mubr.f32.gmra.mrb[0].mxu0 %v648
      %v650 = vpop.f32.mrb[0].mxu0
      %v651 = vadd.f32 %v534, %v650
      %v652 = vpop.f32.mrb[0].mxu0
      %653 = vmatprep.mubr.f32.mxu0 0.0
      %v654 = vand.u32 %v292, 4294901760
      %v655 = vsub.f32 %v292, %v654
      %656 = vmatmul.mubr.f32.gmra.mrb[0].mxu0 %v655
      %v657 = vpop.f32.mrb[0].mxu0
      %v658 = vadd.f32 %v540, %v657
      %v659 = vpop.f32.mrb[0].mxu0
      %660 = vmatprep.mubr.f32.mxu0 0.0
      %v661 = vand.u32 %v295, 4294901760
      %v662 = vsub.f32 %v295, %v661
      %663 = vmatmul.mubr.f32.gmra.mrb[0].mxu0 %v662
      %v664 = vpop.f32.mrb[0].mxu0
      %v665 = vadd.f32 %v546, %v664
      %v666 = vpop.f32.mrb[0].mxu0
      %667 = vmatprep.mubr.f32.mxu0 0.0
      %v668 = vand.u32 %v298, 4294901760
      %v669 = vsub.f32 %v298, %v668
      %670 = vmatmul.mubr.f32.gmra.mrb[0].mxu0 %v669
      %v671 = vpop.f32.mrb[0].mxu0
      %v672 = vadd.f32 %v552, %v671
      %v673 = vpop.f32.mrb[0].mxu0
      %674 = vmatprep.mubr.f32.mxu0 0.0
      %v675 = vand.u32 %v301, 4294901760
      %v676 = vsub.f32 %v301, %v675
      %677 = vmatmul.mubr.f32.gmra.mrb[0].mxu0 %v676
      %v678 = vpop.f32.mrb[0].mxu0
      %v679 = vadd.f32 %v558, %v678
      %v680 = vpop.f32.mrb[0].mxu0
      %681 = vmatprep.mubr.f32.mxu0 0.0
      %v682 = vand.u32 %v304, 4294901760
      %v683 = vsub.f32 %v304, %v682
      %684 = vmatmul.mubr.f32.gmra.mrb[0].mxu0 %v683
      %v685 = vpop.f32.mrb[0].mxu0
      %v686 = vadd.f32 %v564, %v685
      %v687 = vpop.f32.mrb[0].mxu0
      %688 = vmatprep.mubr.f32.mxu0 0.0
      %v689 = vand.u32 %v307, 4294901760
      %v690 = vsub.f32 %v307, %v689
      %691 = vmatmul.mubr.f32.gmra.mrb[0].mxu0 %v690
      %v692 = vpop.f32.mrb[0].mxu0
      %v693 = vadd.f32 %v570, %v692
      %v694 = vpop.f32.mrb[0].mxu0
      %695 = vdwg.mxu0
      %696 = vmatprep.subr.mxu0 0.0
      %v697 = vand.u32 %v244, 4294901760
      %698 = vmatpush1.msra.mxu0 %v697
      %699 = vmatprep.subr.mxu0 0.0
      %700 = vmatpush1.msra.mxu0 0.0
      %701 = vmatprep.subr.mxu0 0.0
      %702 = vmatpush1.msra.mxu0 0.0
      %703 = vmatprep.subr.mxu0 0.0
      %704 = vmatpush1.msra.mxu0 0.0
      %705 = vmatprep.subr.mxu0 0.0
      %706 = vmatpush1.msra.mxu0 0.0
      %707 = vmatprep.subr.mxu0 0.0
      %708 = vmatpush1.msra.mxu0 0.0
      %709 = vmatprep.subr.mxu0 0.0
      %710 = vmatpush1.msra.mxu0 0.0
      %711 = vmatprep.subr.mxu0 0.0
      %712 = vmatpush1.msra.mxu0 0.0
      %713 = vmatprep.subr.mxu0 0.0
      %714 = vmatpush1.msra.mxu0 0.0
      %715 = vmatprep.subr.mxu0 0.0
      %716 = vmatpush1.msra.mxu0 0.0
      %717 = vmatprep.subr.mxu0 0.0
      %718 = vmatpush1.msra.mxu0 0.0
      %719 = vmatprep.subr.mxu0 0.0
      %720 = vmatpush1.msra.mxu0 0.0
      %721 = vmatprep.subr.mxu0 0.0
      %722 = vmatpush1.msra.mxu0 0.0
      %723 = vmatprep.subr.mxu0 0.0
      %724 = vmatpush1.msra.mxu0 0.0
      %725 = vmatprep.subr.mxu0 0.0
      %726 = vmatpush1.msra.mxu0 0.0
      %727 = vmatprep.subr.mxu0 0.0
      %728 = vmatpush1.msra.mxu0 0.0
      %729 = vmatprep.subr.mxu0 0.0
      %730 = vmatpush1.msra.mxu0 0.0
      %731 = vmatprep.subr.mxu0 0.0
      %732 = vmatpush1.msra.mxu0 0.0
      %733 = vmatprep.subr.mxu0 0.0
      %734 = vmatpush1.msra.mxu0 0.0
      %735 = vmatprep.subr.mxu0 0.0
      %736 = vmatpush1.msra.mxu0 0.0
      %737 = vmatprep.subr.mxu0 0.0
      %738 = vmatpush1.msra.mxu0 0.0
      %739 = vmatprep.subr.mxu0 0.0
      %740 = vmatpush1.msra.mxu0 0.0
      %741 = vmatprep.subr.mxu0 0.0
      %742 = vmatpush1.msra.mxu0 0.0
      %743 = vmatprep.subr.mxu0 0.0
      %744 = vmatpush1.msra.mxu0 0.0
      %745 = vmatprep.subr.mxu0 0.0
      %746 = vmatpush1.msra.mxu0 0.0
      %747 = vmatprep.subr.mxu0 0.0
      %748 = vmatpush1.msra.mxu0 0.0
      %749 = vmatprep.subr.mxu0 0.0
      %750 = vmatpush1.msra.mxu0 0.0
      %751 = vmatprep.subr.mxu0 0.0
      %752 = vmatpush1.msra.mxu0 0.0
      %753 = vmatprep.subr.mxu0 0.0
      %754 = vmatpush1.msra.mxu0 0.0
      %755 = vmatprep.subr.mxu0 0.0
      %756 = vmatpush1.msra.mxu0 0.0
      %757 = vmatprep.subr.mxu0 0.0
      %758 = vmatpush1.msra.mxu0 0.0
      %759 = vmatprep.subr.mxu0 0.0
      %760 = vmatpush1.msra.mxu0 0.0
      %761 = vmatprep.mubr.f32.mxu0 0.0
      %v762 = vand.u32 %v286, 4294901760
      %v763 = vsub.f32 %v286, %v762
      %v764 = vand.u32 %v763, 4294901760
      %765 = vmatmul.mubr.f32.gmra.mrb[0].mxu0 %v764
      %v766 = vpop.f32.mrb[0].mxu0
      %v767 = vadd.f32 %v644, %v766
      %v768 = vpop.f32.mrb[0].mxu0
      %769 = vmatprep.mubr.f32.mxu0 0.0
      %v770 = vand.u32 %v289, 4294901760
      %v771 = vsub.f32 %v289, %v770
      %v772 = vand.u32 %v771, 4294901760
      %773 = vmatmul.mubr.f32.gmra.mrb[0].mxu0 %v772
      %v774 = vpop.f32.mrb[0].mxu0
      %v775 = vadd.f32 %v651, %v774
      %v776 = vpop.f32.mrb[0].mxu0
      %777 = vmatprep.mubr.f32.mxu0 0.0
      %v778 = vand.u32 %v292, 4294901760
      %v779 = vsub.f32 %v292, %v778
      %v780 = vand.u32 %v779, 4294901760
      %781 = vmatmul.mubr.f32.gmra.mrb[0].mxu0 %v780
      %v782 = vpop.f32.mrb[0].mxu0
      %v783 = vadd.f32 %v658, %v782
      %v784 = vpop.f32.mrb[0].mxu0
      %785 = vmatprep.mubr.f32.mxu0 0.0
      %v786 = vand.u32 %v295, 4294901760
      %v787 = vsub.f32 %v295, %v786
      %v788 = vand.u32 %v787, 4294901760
      %789 = vmatmul.mubr.f32.gmra.mrb[0].mxu0 %v788
      %v790 = vpop.f32.mrb[0].mxu0
      %v791 = vadd.f32 %v665, %v790
      %v792 = vpop.f32.mrb[0].mxu0
      %793 = vmatprep.mubr.f32.mxu0 0.0
      %v794 = vand.u32 %v298, 4294901760
      %v795 = vsub.f32 %v298, %v794
      %v796 = vand.u32 %v795, 4294901760
      %797 = vmatmul.mubr.f32.gmra.mrb[0].mxu0 %v796
      %v798 = vpop.f32.mrb[0].mxu0
      %v799 = vadd.f32 %v672, %v798
      %v800 = vpop.f32.mrb[0].mxu0
      %801 = vmatprep.mubr.f32.mxu0 0.0
      %v802 = vand.u32 %v301, 4294901760
      %v803 = vsub.f32 %v301, %v802
      %v804 = vand.u32 %v803, 4294901760
      %805 = vmatmul.mubr.f32.gmra.mrb[0].mxu0 %v804
      %v806 = vpop.f32.mrb[0].mxu0
      %v807 = vadd.f32 %v679, %v806
      %v808 = vpop.f32.mrb[0].mxu0
      %809 = vmatprep.mubr.f32.mxu0 0.0
      %v810 = vand.u32 %v304, 4294901760
      %v811 = vsub.f32 %v304, %v810
      %v812 = vand.u32 %v811, 4294901760
      %813 = vmatmul.mubr.f32.gmra.mrb[0].mxu0 %v812
      %v814 = vpop.f32.mrb[0].mxu0
      %v815 = vadd.f32 %v686, %v814
      %v816 = vpop.f32.mrb[0].mxu0
      %817 = vmatprep.mubr.f32.mxu0 0.0
      %v818 = vand.u32 %v307, 4294901760
      %v819 = vsub.f32 %v307, %v818
      %v820 = vand.u32 %v819, 4294901760
      %821 = vmatmul.mubr.f32.gmra.mrb[0].mxu0 %v820
      %v822 = vpop.f32.mrb[0].mxu0
      %v823 = vadd.f32 %v693, %v822
      %v824 = vpop.f32.mrb[0].mxu0
      %825 = vdwg.mxu0
      %826 = vmatprep.subr.mxu0 0.0
      %v827 = vand.u32 %v244, 4294901760
      %v828 = vsub.f32 %v244, %v827
      %v829 = vand.u32 %v828, 4294901760
      %830 = vmatpush1.msra.mxu0 %v829
      %831 = vmatprep.subr.mxu0 0.0
      %832 = vmatpush1.msra.mxu0 0.0
      %833 = vmatprep.subr.mxu0 0.0
      %834 = vmatpush1.msra.mxu0 0.0
      %835 = vmatprep.subr.mxu0 0.0
      %836 = vmatpush1.msra.mxu0 0.0
      %837 = vmatprep.subr.mxu0 0.0
      %838 = vmatpush1.msra.mxu0 0.0
      %839 = vmatprep.subr.mxu0 0.0
      %840 = vmatpush1.msra.mxu0 0.0
      %841 = vmatprep.subr.mxu0 0.0
      %842 = vmatpush1.msra.mxu0 0.0
      %843 = vmatprep.subr.mxu0 0.0
      %844 = vmatpush1.msra.mxu0 0.0
      %845 = vmatprep.subr.mxu0 0.0
      %846 = vmatpush1.msra.mxu0 0.0
      %847 = vmatprep.subr.mxu0 0.0
      %848 = vmatpush1.msra.mxu0 0.0
      %849 = vmatprep.subr.mxu0 0.0
      %850 = vmatpush1.msra.mxu0 0.0
      %851 = vmatprep.subr.mxu0 0.0
      %852 = vmatpush1.msra.mxu0 0.0
      %853 = vmatprep.subr.mxu0 0.0
      %854 = vmatpush1.msra.mxu0 0.0
      %855 = vmatprep.subr.mxu0 0.0
      %856 = vmatpush1.msra.mxu0 0.0
      %857 = vmatprep.subr.mxu0 0.0
      %858 = vmatpush1.msra.mxu0 0.0
      %859 = vmatprep.subr.mxu0 0.0
      %860 = vmatpush1.msra.mxu0 0.0
      %861 = vmatprep.subr.mxu0 0.0
      %862 = vmatpush1.msra.mxu0 0.0
      %863 = vmatprep.subr.mxu0 0.0
      %864 = vmatpush1.msra.mxu0 0.0
      %865 = vmatprep.subr.mxu0 0.0
      %866 = vmatpush1.msra.mxu0 0.0
      %867 = vmatprep.subr.mxu0 0.0
      %868 = vmatpush1.msra.mxu0 0.0
      %869 = vmatprep.subr.mxu0 0.0
      %870 = vmatpush1.msra.mxu0 0.0
      %871 = vmatprep.subr.mxu0 0.0
      %872 = vmatpush1.msra.mxu0 0.0
      %873 = vmatprep.subr.mxu0 0.0
      %874 = vmatpush1.msra.mxu0 0.0
      %875 = vmatprep.subr.mxu0 0.0
      %876 = vmatpush1.msra.mxu0 0.0
      %877 = vmatprep.subr.mxu0 0.0
      %878 = vmatpush1.msra.mxu0 0.0
      %879 = vmatprep.subr.mxu0 0.0
      %880 = vmatpush1.msra.mxu0 0.0
      %881 = vmatprep.subr.mxu0 0.0
      %882 = vmatpush1.msra.mxu0 0.0
      %883 = vmatprep.subr.mxu0 0.0
      %884 = vmatpush1.msra.mxu0 0.0
      %885 = vmatprep.subr.mxu0 0.0
      %886 = vmatpush1.msra.mxu0 0.0
      %887 = vmatprep.subr.mxu0 0.0
      %888 = vmatpush1.msra.mxu0 0.0
      %889 = vmatprep.subr.mxu0 0.0
      %890 = vmatpush1.msra.mxu0 0.0
      %891 = vmatprep.subr.mxu0 0.0
      %892 = vmatpush1.msra.mxu0 0.0
      %893 = vmatprep.mubr.f32.mxu0 0.0
      %v894 = vand.u32 %v286, 4294901760
      %895 = vmatmul.mubr.f32.gmra.mrb[0].mxu0 %v894
      %v896 = vpop.f32.mrb[0].mxu0
      %v897 = vadd.f32 %v767, %v896
      %v898 = vpop.f32.mrb[0].mxu0
      %899 = vmatprep.mubr.f32.mxu0 0.0
      %v900 = vand.u32 %v289, 4294901760
      %901 = vmatmul.mubr.f32.gmra.mrb[0].mxu0 %v900
      %v902 = vpop.f32.mrb[0].mxu0
      %v903 = vadd.f32 %v775, %v902
      %v904 = vpop.f32.mrb[0].mxu0
      %905 = vmatprep.mubr.f32.mxu0 0.0
      %v906 = vand.u32 %v292, 4294901760
      %907 = vmatmul.mubr.f32.gmra.mrb[0].mxu0 %v906
      %v908 = vpop.f32.mrb[0].mxu0
      %v909 = vadd.f32 %v783, %v908
      %v910 = vpop.f32.mrb[0].mxu0
      %911 = vmatprep.mubr.f32.mxu0 0.0
      %v912 = vand.u32 %v295, 4294901760
      %913 = vmatmul.mubr.f32.gmra.mrb[0].mxu0 %v912
      %v914 = vpop.f32.mrb[0].mxu0
      %v915 = vadd.f32 %v791, %v914
      %v916 = vpop.f32.mrb[0].mxu0
      %917 = vmatprep.mubr.f32.mxu0 0.0
      %v918 = vand.u32 %v298, 4294901760
      %919 = vmatmul.mubr.f32.gmra.mrb[0].mxu0 %v918
      %v920 = vpop.f32.mrb[0].mxu0
      %v921 = vadd.f32 %v799, %v920
      %v922 = vpop.f32.mrb[0].mxu0
      %923 = vmatprep.mubr.f32.mxu0 0.0
      %v924 = vand.u32 %v301, 4294901760
      %925 = vmatmul.mubr.f32.gmra.mrb[0].mxu0 %v924
      %v926 = vpop.f32.mrb[0].mxu0
      %v927 = vadd.f32 %v807, %v926
      %v928 = vpop.f32.mrb[0].mxu0
      %929 = vmatprep.mubr.f32.mxu0 0.0
      %v930 = vand.u32 %v304, 4294901760
      %931 = vmatmul.mubr.f32.gmra.mrb[0].mxu0 %v930
      %v932 = vpop.f32.mrb[0].mxu0
      %v933 = vadd.f32 %v815, %v932
      %v934 = vpop.f32.mrb[0].mxu0
      %935 = vmatprep.mubr.f32.mxu0 0.0
      %v936 = vand.u32 %v307, 4294901760
      %937 = vmatmul.mubr.f32.gmra.mrb[0].mxu0 %v936
      %v938 = vpop.f32.mrb[0].mxu0
      %v939 = vadd.f32 %v823, %v938
      %v940 = vpop.f32.mrb[0].mxu0
      %941 = vdwg.mxu0
      %942 = vmatprep.subr.mxu0 0.0
      %v943 = vand.u32 %v244, 4294901760
      %944 = vmatpush1.msra.mxu0 %v943
      %945 = vmatprep.subr.mxu0 0.0
      %946 = vmatpush1.msra.mxu0 0.0
      %947 = vmatprep.subr.mxu0 0.0
      %948 = vmatpush1.msra.mxu0 0.0
      %949 = vmatprep.subr.mxu0 0.0
      %950 = vmatpush1.msra.mxu0 0.0
      %951 = vmatprep.subr.mxu0 0.0
      %952 = vmatpush1.msra.mxu0 0.0
      %953 = vmatprep.subr.mxu0 0.0
      %954 = vmatpush1.msra.mxu0 0.0
      %955 = vmatprep.subr.mxu0 0.0
      %956 = vmatpush1.msra.mxu0 0.0
      %957 = vmatprep.subr.mxu0 0.0
      %958 = vmatpush1.msra.mxu0 0.0
      %959 = vmatprep.subr.mxu0 0.0
      %960 = vmatpush1.msra.mxu0 0.0
      %961 = vmatprep.subr.mxu0 0.0
      %962 = vmatpush1.msra.mxu0 0.0
      %963 = vmatprep.subr.mxu0 0.0
      %964 = vmatpush1.msra.mxu0 0.0
      %965 = vmatprep.subr.mxu0 0.0
      %966 = vmatpush1.msra.mxu0 0.0
      %967 = vmatprep.subr.mxu0 0.0
      %968 = vmatpush1.msra.mxu0 0.0
      %969 = vmatprep.subr.mxu0 0.0
      %970 = vmatpush1.msra.mxu0 0.0
      %971 = vmatprep.subr.mxu0 0.0
      %972 = vmatpush1.msra.mxu0 0.0
      %973 = vmatprep.subr.mxu0 0.0
      %974 = vmatpush1.msra.mxu0 0.0
      %975 = vmatprep.subr.mxu0 0.0
      %976 = vmatpush1.msra.mxu0 0.0
      %977 = vmatprep.subr.mxu0 0.0
      %978 = vmatpush1.msra.mxu0 0.0
      %979 = vmatprep.subr.mxu0 0.0
      %980 = vmatpush1.msra.mxu0 0.0
      %981 = vmatprep.subr.mxu0 0.0
      %982 = vmatpush1.msra.mxu0 0.0
      %983 = vmatprep.subr.mxu0 0.0
      %984 = vmatpush1.msra.mxu0 0.0
      %985 = vmatprep.subr.mxu0 0.0
      %986 = vmatpush1.msra.mxu0 0.0
      %987 = vmatprep.subr.mxu0 0.0
      %988 = vmatpush1.msra.mxu0 0.0
      %989 = vmatprep.subr.mxu0 0.0
      %990 = vmatpush1.msra.mxu0 0.0
      %991 = vmatprep.subr.mxu0 0.0
      %992 = vmatpush1.msra.mxu0 0.0
      %993 = vmatprep.subr.mxu0 0.0
      %994 = vmatpush1.msra.mxu0 0.0
      %995 = vmatprep.subr.mxu0 0.0
      %996 = vmatpush1.msra.mxu0 0.0
      %997 = vmatprep.subr.mxu0 0.0
      %998 = vmatpush1.msra.mxu0 0.0
      %999 = vmatprep.subr.mxu0 0.0
      %1000 = vmatpush1.msra.mxu0 0.0
      %1001 = vmatprep.subr.mxu0 0.0
      %1002 = vmatpush1.msra.mxu0 0.0
      %1003 = vmatprep.subr.mxu0 0.0
      %1004 = vmatpush1.msra.mxu0 0.0
      %1005 = vmatprep.subr.mxu0 0.0
      %1006 = vmatpush1.msra.mxu0 0.0
      %1007 = vmatprep.mubr.f32.mxu0 0.0
      %v1008 = vand.u32 %v286, 4294901760
      %1009 = vmatmul.mubr.f32.gmra.mrb[0].mxu0 %v1008
      %v1010 = vpop.f32.mrb[0].mxu0
      %v1011 = vadd.f32 %v897, %v1010
      %v1012 = vpop.f32.mrb[0].mxu0
      %1013 = vmatprep.mubr.f32.mxu0 0.0
      %v1014 = vand.u32 %v289, 4294901760
      %1015 = vmatmul.mubr.f32.gmra.mrb[0].mxu0 %v1014
      %v1016 = vpop.f32.mrb[0].mxu0
      %v1017 = vadd.f32 %v903, %v1016
      %v1018 = vpop.f32.mrb[0].mxu0
      %1019 = vmatprep.mubr.f32.mxu0 0.0
      %v1020 = vand.u32 %v292, 4294901760
      %1021 = vmatmul.mubr.f32.gmra.mrb[0].mxu0 %v1020
      %v1022 = vpop.f32.mrb[0].mxu0
      %v1023 = vadd.f32 %v909, %v1022
      %v1024 = vpop.f32.mrb[0].mxu0
      %1025 = vmatprep.mubr.f32.mxu0 0.0
      %v1026 = vand.u32 %v295, 4294901760
      %1027 = vmatmul.mubr.f32.gmra.mrb[0].mxu0 %v1026
      %v1028 = vpop.f32.mrb[0].mxu0
      %v1029 = vadd.f32 %v915, %v1028
      %v1030 = vpop.f32.mrb[0].mxu0
      %1031 = vmatprep.mubr.f32.mxu0 0.0
      %v1032 = vand.u32 %v298, 4294901760
      %1033 = vmatmul.mubr.f32.gmra.mrb[0].mxu0 %v1032
      %v1034 = vpop.f32.mrb[0].mxu0
      %v1035 = vadd.f32 %v921, %v1034
      %v1036 = vpop.f32.mrb[0].mxu0
      %1037 = vmatprep.mubr.f32.mxu0 0.0
      %v1038 = vand.u32 %v301, 4294901760
      %1039 = vmatmul.mubr.f32.gmra.mrb[0].mxu0 %v1038
      %v1040 = vpop.f32.mrb[0].mxu0
      %v1041 = vadd.f32 %v927, %v1040
      %v1042 = vpop.f32.mrb[0].mxu0
      %1043 = vmatprep.mubr.f32.mxu0 0.0
      %v1044 = vand.u32 %v304, 4294901760
      %1045 = vmatmul.mubr.f32.gmra.mrb[0].mxu0 %v1044
      %v1046 = vpop.f32.mrb[0].mxu0
      %v1047 = vadd.f32 %v933, %v1046
      %v1048 = vpop.f32.mrb[0].mxu0
      %1049 = vmatprep.mubr.f32.mxu0 0.0
      %v1050 = vand.u32 %v307, 4294901760
      %1051 = vmatmul.mubr.f32.gmra.mrb[0].mxu0 %v1050
      %v1052 = vpop.f32.mrb[0].mxu0
      %v1053 = vadd.f32 %v939, %v1052
      %v1054 = vpop.f32.mrb[0].mxu0
      %1055 = vdwg.mxu0
      %v1056 = vmul.f32 %v1011, 2.0
      %v1057 = vmul.f32 %v1017, 2.0
      %v1058 = vmul.f32 %v1023, 2.0
      %v1059 = vmul.f32 %v1029, 2.0
      %v1060 = vmul.f32 %v1035, 2.0
      %v1061 = vmul.f32 %v1041, 2.0
      %v1062 = vmul.f32 %v1047, 2.0
      %v1063 = vmul.f32 %v1053, 2.0
      %v1064 = vsub.f32 %v256, %v1056
      %v1065 = vsub.f32 %v259, %v1057
      %v1066 = vsub.f32 %v262, %v1058
      %v1067 = vsub.f32 %v265, %v1059
      %v1068 = vsub.f32 %v268, %v1060
      %v1069 = vsub.f32 %v271, %v1061
      %v1070 = vsub.f32 %v274, %v1062
      %v1071 = vsub.f32 %v277, %v1063
      %v1072 = vlaneseq
      %v1073 = vshrl.u32 %v1072, 7
      %v1074 = vadd.s32 %v1073, 8
      %v1075 = vadd.s32 %v1073, 16
      %v1076 = vadd.s32 %v1073, 24
      %v1077 = vadd.s32 %v1073, 32
      %v1078 = vadd.s32 %v1073, 40
      %v1079 = vadd.s32 %v1073, 48
      %v1080 = vadd.s32 %v1073, 56
      %v1081 = vmin.f32 %v1064, %v1068
      %v1082 = vmin.f32 %v1065, %v1069
      %v1083 = vmin.f32 %v1066, %v1070
      %v1084 = vmin.f32 %v1067, %v1071
      %v1085 = vmin.f32 %v1081, %v1082
      %v1086 = vmin.f32 %v1083, %v1084
      %v1087 = vmin.f32 %v1085, %v1086
      %v1088 = vrot.slane %v1087, 4
      %v1089 = vmin.f32 %v1087, %v1088
      %v1090 = vrot.slane %v1089, 2
      %v1091 = vmin.f32 %v1089, %v1090
      %v1092 = vrot.slane %v1091, 1
      %v1093 = vmin.f32 %v1091, %v1092
      %vm1094 = vcmp.eq.f32.partialorder %v1064, %v1093
      %vm1095 = vcmp.eq.f32.partialorder %v1065, %v1093
      %vm1096 = vcmp.eq.f32.partialorder %v1066, %v1093
      %vm1097 = vcmp.eq.f32.partialorder %v1067, %v1093
      %vm1098 = vcmp.eq.f32.partialorder %v1068, %v1093
      %vm1099 = vcmp.eq.f32.partialorder %v1069, %v1093
      %vm1100 = vcmp.eq.f32.partialorder %v1070, %v1093
      %vm1101 = vcmp.eq.f32.partialorder %v1071, %v1093
      %v1102 = vsel %vm1094, %v1073, 64
      %v1103 = vsel %vm1095, %v1074, 64
      %v1104 = vsel %vm1096, %v1075, 64
      %v1105 = vsel %vm1097, %v1076, 64
      %v1106 = vsel %vm1098, %v1077, 64
      %v1107 = vsel %vm1099, %v1078, 64
      %v1108 = vsel %vm1100, %v1079, 64
      %v1109 = vsel %vm1101, %v1080, 64
      %vm1110 = vcmp.lt.s32.totalorder %v1102, %v1106
      %v1111 = vsel %vm1110, %v1102, %v1106
      %vm1112 = vcmp.lt.s32.totalorder %v1103, %v1107
      %v1113 = vsel %vm1112, %v1103, %v1107
      %vm1114 = vcmp.lt.s32.totalorder %v1104, %v1108
      %v1115 = vsel %vm1114, %v1104, %v1108
      %vm1116 = vcmp.lt.s32.totalorder %v1105, %v1109
      %v1117 = vsel %vm1116, %v1105, %v1109
      %vm1118 = vcmp.lt.s32.totalorder %v1111, %v1113
      %v1119 = vsel %vm1118, %v1111, %v1113
      %vm1120 = vcmp.lt.s32.totalorder %v1115, %v1117
      %v1121 = vsel %vm1120, %v1115, %v1117
      %vm1122 = vcmp.lt.s32.totalorder %v1119, %v1121
      %v1123 = vsel %vm1122, %v1119, %v1121
      %v1124 = vrot.slane %v1123, 4
      %vm1125 = vcmp.lt.s32.totalorder %v1123, %v1124
      %v1126 = vsel %vm1125, %v1123, %v1124
      %v1127 = vrot.slane %v1126, 2
      %vm1128 = vcmp.lt.s32.totalorder %v1126, %v1127
      %v1129 = vsel %vm1128, %v1126, %v1127
      %v1130 = vrot.slane %v1129, 1
      %vm1131 = vcmp.lt.s32.totalorder %v1129, %v1130
      %v1132 = vsel %vm1131, %v1129, %v1130
      %v1133 = vadd.f32 %v1093, %v284
      %v1134 = vmax.f32 %v1133, 0.0
      %v1135 = vrsqrt.pop %v1134
      %v1136 = vmul.f32 %v1134, %v1135
      %vm1137 = vcmp.eq.f32.partialorder %v1134, inf
      %v1138 = vsel %vm1137, %v1134, %v1136
      %vm1139 = vcmp.eq.f32.partialorder %v1134, 0.0
      %v1140 = vand.u32 %v1134, 2147483648
      %v1141 = vsel %vm1139, %v1140, %v1138
      %1142 = vst [vmem:[%s228] sm:$0x1] %v1141
      %1143 = vst [vmem:[%s235] sm:$0x1] %v1132
      %vm1144 = vcmp.eq.s32.totalorder %v1102, %v1132
      %vm1145 = vcmp.eq.s32.totalorder %v1103, %v1132
      %vm1146 = vcmp.eq.s32.totalorder %v1104, %v1132
      %vm1147 = vcmp.eq.s32.totalorder %v1105, %v1132
      %vm1148 = vcmp.eq.s32.totalorder %v1106, %v1132
      %vm1149 = vcmp.eq.s32.totalorder %v1107, %v1132
      %vm1150 = vcmp.eq.s32.totalorder %v1108, %v1132
      %vm1151 = vcmp.eq.s32.totalorder %v1109, %v1132
      %v1152 = vsel %vm1144, inf, %v1064
      %v1153 = vsel %vm1145, inf, %v1065
      %v1154 = vsel %vm1146, inf, %v1066
      %v1155 = vsel %vm1147, inf, %v1067
      %v1156 = vsel %vm1148, inf, %v1068
      %v1157 = vsel %vm1149, inf, %v1069
      %v1158 = vsel %vm1150, inf, %v1070
      %v1159 = vsel %vm1151, inf, %v1071
      %v1160 = vmin.f32 %v1152, %v1156
      %v1161 = vmin.f32 %v1153, %v1157
      %v1162 = vmin.f32 %v1154, %v1158
      %v1163 = vmin.f32 %v1155, %v1159
      %v1164 = vmin.f32 %v1160, %v1161
      %v1165 = vmin.f32 %v1162, %v1163
      %v1166 = vmin.f32 %v1164, %v1165
      %v1167 = vrot.slane %v1166, 4
      %v1168 = vmin.f32 %v1166, %v1167
      %v1169 = vrot.slane %v1168, 2
      %v1170 = vmin.f32 %v1168, %v1169
      %v1171 = vrot.slane %v1170, 1
      %v1172 = vmin.f32 %v1170, %v1171
      %vm1173 = vcmp.eq.f32.partialorder %v1152, %v1172
      %vm1174 = vcmp.eq.f32.partialorder %v1153, %v1172
      %vm1175 = vcmp.eq.f32.partialorder %v1154, %v1172
      %vm1176 = vcmp.eq.f32.partialorder %v1155, %v1172
      %vm1177 = vcmp.eq.f32.partialorder %v1156, %v1172
      %vm1178 = vcmp.eq.f32.partialorder %v1157, %v1172
      %vm1179 = vcmp.eq.f32.partialorder %v1158, %v1172
      %vm1180 = vcmp.eq.f32.partialorder %v1159, %v1172
      %v1181 = vsel %vm1173, %v1073, 64
      %v1182 = vsel %vm1174, %v1074, 64
      %v1183 = vsel %vm1175, %v1075, 64
      %v1184 = vsel %vm1176, %v1076, 64
      %v1185 = vsel %vm1177, %v1077, 64
      %v1186 = vsel %vm1178, %v1078, 64
      %v1187 = vsel %vm1179, %v1079, 64
      %v1188 = vsel %vm1180, %v1080, 64
      %vm1189 = vcmp.lt.s32.totalorder %v1181, %v1185
      %v1190 = vsel %vm1189, %v1181, %v1185
      %vm1191 = vcmp.lt.s32.totalorder %v1182, %v1186
      %v1192 = vsel %vm1191, %v1182, %v1186
      %vm1193 = vcmp.lt.s32.totalorder %v1183, %v1187
      %v1194 = vsel %vm1193, %v1183, %v1187
      %vm1195 = vcmp.lt.s32.totalorder %v1184, %v1188
      %v1196 = vsel %vm1195, %v1184, %v1188
      %vm1197 = vcmp.lt.s32.totalorder %v1190, %v1192
      %v1198 = vsel %vm1197, %v1190, %v1192
      %vm1199 = vcmp.lt.s32.totalorder %v1194, %v1196
      %v1200 = vsel %vm1199, %v1194, %v1196
      %vm1201 = vcmp.lt.s32.totalorder %v1198, %v1200
      %v1202 = vsel %vm1201, %v1198, %v1200
      %v1203 = vrot.slane %v1202, 4
      %vm1204 = vcmp.lt.s32.totalorder %v1202, %v1203
      %v1205 = vsel %vm1204, %v1202, %v1203
      %v1206 = vrot.slane %v1205, 2
      %vm1207 = vcmp.lt.s32.totalorder %v1205, %v1206
      %v1208 = vsel %vm1207, %v1205, %v1206
      %v1209 = vrot.slane %v1208, 1
      %vm1210 = vcmp.lt.s32.totalorder %v1208, %v1209
      %v1211 = vsel %vm1210, %v1208, %v1209
      %v1212 = vadd.f32 %v1172, %v284
      %v1213 = vmax.f32 %v1212, 0.0
      %v1214 = vrsqrt.pop %v1213
      %v1215 = vmul.f32 %v1213, %v1214
      %vm1216 = vcmp.eq.f32.partialorder %v1213, inf
      %v1217 = vsel %vm1216, %v1213, %v1215
      %vm1218 = vcmp.eq.f32.partialorder %v1213, 0.0
      %v1219 = vand.u32 %v1213, 2147483648
      %v1220 = vsel %vm1218, %v1219, %v1217
      %1221 = vst [vmem:[%s228 + $0x1] sm:$0x1] %v1220
      %1222 = vst [vmem:[%s235 + $0x1] sm:$0x1] %v1211
      %vm1223 = vcmp.eq.s32.totalorder %v1181, %v1211
      %vm1224 = vcmp.eq.s32.totalorder %v1182, %v1211
      %vm1225 = vcmp.eq.s32.totalorder %v1183, %v1211
      %vm1226 = vcmp.eq.s32.totalorder %v1184, %v1211
      %vm1227 = vcmp.eq.s32.totalorder %v1185, %v1211
      %vm1228 = vcmp.eq.s32.totalorder %v1186, %v1211
      %vm1229 = vcmp.eq.s32.totalorder %v1187, %v1211
      %vm1230 = vcmp.eq.s32.totalorder %v1188, %v1211
      %v1231 = vsel %vm1223, inf, %v1152
      %v1232 = vsel %vm1224, inf, %v1153
      %v1233 = vsel %vm1225, inf, %v1154
      %v1234 = vsel %vm1226, inf, %v1155
      %v1235 = vsel %vm1227, inf, %v1156
      %v1236 = vsel %vm1228, inf, %v1157
      %v1237 = vsel %vm1229, inf, %v1158
      %v1238 = vsel %vm1230, inf, %v1159
      %v1239 = vmin.f32 %v1231, %v1235
      %v1240 = vmin.f32 %v1232, %v1236
      %v1241 = vmin.f32 %v1233, %v1237
      %v1242 = vmin.f32 %v1234, %v1238
      %v1243 = vmin.f32 %v1239, %v1240
      %v1244 = vmin.f32 %v1241, %v1242
      %v1245 = vmin.f32 %v1243, %v1244
      %v1246 = vrot.slane %v1245, 4
      %v1247 = vmin.f32 %v1245, %v1246
      %v1248 = vrot.slane %v1247, 2
      %v1249 = vmin.f32 %v1247, %v1248
      %v1250 = vrot.slane %v1249, 1
      %v1251 = vmin.f32 %v1249, %v1250
      %vm1252 = vcmp.eq.f32.partialorder %v1231, %v1251
      %vm1253 = vcmp.eq.f32.partialorder %v1232, %v1251
      %vm1254 = vcmp.eq.f32.partialorder %v1233, %v1251
      %vm1255 = vcmp.eq.f32.partialorder %v1234, %v1251
      %vm1256 = vcmp.eq.f32.partialorder %v1235, %v1251
      %vm1257 = vcmp.eq.f32.partialorder %v1236, %v1251
      %vm1258 = vcmp.eq.f32.partialorder %v1237, %v1251
      %vm1259 = vcmp.eq.f32.partialorder %v1238, %v1251
      %v1260 = vsel %vm1252, %v1073, 64
      %v1261 = vsel %vm1253, %v1074, 64
      %v1262 = vsel %vm1254, %v1075, 64
      %v1263 = vsel %vm1255, %v1076, 64
      %v1264 = vsel %vm1256, %v1077, 64
      %v1265 = vsel %vm1257, %v1078, 64
      %v1266 = vsel %vm1258, %v1079, 64
      %v1267 = vsel %vm1259, %v1080, 64
      %vm1268 = vcmp.lt.s32.totalorder %v1260, %v1264
      %v1269 = vsel %vm1268, %v1260, %v1264
      %vm1270 = vcmp.lt.s32.totalorder %v1261, %v1265
      %v1271 = vsel %vm1270, %v1261, %v1265
      %vm1272 = vcmp.lt.s32.totalorder %v1262, %v1266
      %v1273 = vsel %vm1272, %v1262, %v1266
      %vm1274 = vcmp.lt.s32.totalorder %v1263, %v1267
      %v1275 = vsel %vm1274, %v1263, %v1267
      %vm1276 = vcmp.lt.s32.totalorder %v1269, %v1271
      %v1277 = vsel %vm1276, %v1269, %v1271
      %vm1278 = vcmp.lt.s32.totalorder %v1273, %v1275
      %v1279 = vsel %vm1278, %v1273, %v1275
      %vm1280 = vcmp.lt.s32.totalorder %v1277, %v1279
      %v1281 = vsel %vm1280, %v1277, %v1279
      %v1282 = vrot.slane %v1281, 4
      %vm1283 = vcmp.lt.s32.totalorder %v1281, %v1282
      %v1284 = vsel %vm1283, %v1281, %v1282
      %v1285 = vrot.slane %v1284, 2
      %vm1286 = vcmp.lt.s32.totalorder %v1284, %v1285
      %v1287 = vsel %vm1286, %v1284, %v1285
      %v1288 = vrot.slane %v1287, 1
      %vm1289 = vcmp.lt.s32.totalorder %v1287, %v1288
      %v1290 = vsel %vm1289, %v1287, %v1288
      %v1291 = vadd.f32 %v1251, %v284
      %v1292 = vmax.f32 %v1291, 0.0
      %v1293 = vrsqrt.pop %v1292
      %v1294 = vmul.f32 %v1292, %v1293
      %vm1295 = vcmp.eq.f32.partialorder %v1292, inf
      %v1296 = vsel %vm1295, %v1292, %v1294
      %vm1297 = vcmp.eq.f32.partialorder %v1292, 0.0
      %v1298 = vand.u32 %v1292, 2147483648
      %v1299 = vsel %vm1297, %v1298, %v1296
      %1300 = vst [vmem:[%s228 + $0x2] sm:$0x1] %v1299
      %1301 = vst [vmem:[%s235 + $0x2] sm:$0x1] %v1290
      %vm1302 = vcmp.eq.s32.totalorder %v1260, %v1290
      %vm1303 = vcmp.eq.s32.totalorder %v1261, %v1290
      %vm1304 = vcmp.eq.s32.totalorder %v1262, %v1290
      %vm1305 = vcmp.eq.s32.totalorder %v1263, %v1290
      %vm1306 = vcmp.eq.s32.totalorder %v1264, %v1290
      %vm1307 = vcmp.eq.s32.totalorder %v1265, %v1290
      %vm1308 = vcmp.eq.s32.totalorder %v1266, %v1290
      %vm1309 = vcmp.eq.s32.totalorder %v1267, %v1290
      %v1310 = vsel %vm1302, inf, %v1231
      %v1311 = vsel %vm1303, inf, %v1232
      %v1312 = vsel %vm1304, inf, %v1233
      %v1313 = vsel %vm1305, inf, %v1234
      %v1314 = vsel %vm1306, inf, %v1235
      %v1315 = vsel %vm1307, inf, %v1236
      %v1316 = vsel %vm1308, inf, %v1237
      %v1317 = vsel %vm1309, inf, %v1238
      %v1318 = vmin.f32 %v1310, %v1314
      %v1319 = vmin.f32 %v1311, %v1315
      %v1320 = vmin.f32 %v1312, %v1316
      %v1321 = vmin.f32 %v1313, %v1317
      %v1322 = vmin.f32 %v1318, %v1319
      %v1323 = vmin.f32 %v1320, %v1321
      %v1324 = vmin.f32 %v1322, %v1323
      %v1325 = vrot.slane %v1324, 4
      %v1326 = vmin.f32 %v1324, %v1325
      %v1327 = vrot.slane %v1326, 2
      %v1328 = vmin.f32 %v1326, %v1327
      %v1329 = vrot.slane %v1328, 1
      %v1330 = vmin.f32 %v1328, %v1329
      %vm1331 = vcmp.eq.f32.partialorder %v1310, %v1330
      %vm1332 = vcmp.eq.f32.partialorder %v1311, %v1330
      %vm1333 = vcmp.eq.f32.partialorder %v1312, %v1330
      %vm1334 = vcmp.eq.f32.partialorder %v1313, %v1330
      %vm1335 = vcmp.eq.f32.partialorder %v1314, %v1330
      %vm1336 = vcmp.eq.f32.partialorder %v1315, %v1330
      %vm1337 = vcmp.eq.f32.partialorder %v1316, %v1330
      %vm1338 = vcmp.eq.f32.partialorder %v1317, %v1330
      %v1339 = vsel %vm1331, %v1073, 64
      %v1340 = vsel %vm1332, %v1074, 64
      %v1341 = vsel %vm1333, %v1075, 64
      %v1342 = vsel %vm1334, %v1076, 64
      %v1343 = vsel %vm1335, %v1077, 64
      %v1344 = vsel %vm1336, %v1078, 64
      %v1345 = vsel %vm1337, %v1079, 64
      %v1346 = vsel %vm1338, %v1080, 64
      %vm1347 = vcmp.lt.s32.totalorder %v1339, %v1343
      %v1348 = vsel %vm1347, %v1339, %v1343
      %vm1349 = vcmp.lt.s32.totalorder %v1340, %v1344
      %v1350 = vsel %vm1349, %v1340, %v1344
      %vm1351 = vcmp.lt.s32.totalorder %v1341, %v1345
      %v1352 = vsel %vm1351, %v1341, %v1345
      %vm1353 = vcmp.lt.s32.totalorder %v1342, %v1346
      %v1354 = vsel %vm1353, %v1342, %v1346
      %vm1355 = vcmp.lt.s32.totalorder %v1348, %v1350
      %v1356 = vsel %vm1355, %v1348, %v1350
      %vm1357 = vcmp.lt.s32.totalorder %v1352, %v1354
      %v1358 = vsel %vm1357, %v1352, %v1354
      %vm1359 = vcmp.lt.s32.totalorder %v1356, %v1358
      %v1360 = vsel %vm1359, %v1356, %v1358
      %v1361 = vrot.slane %v1360, 4
      %vm1362 = vcmp.lt.s32.totalorder %v1360, %v1361
      %v1363 = vsel %vm1362, %v1360, %v1361
      %v1364 = vrot.slane %v1363, 2
      %vm1365 = vcmp.lt.s32.totalorder %v1363, %v1364
      %v1366 = vsel %vm1365, %v1363, %v1364
      %v1367 = vrot.slane %v1366, 1
      %vm1368 = vcmp.lt.s32.totalorder %v1366, %v1367
      %v1369 = vsel %vm1368, %v1366, %v1367
      %v1370 = vadd.f32 %v1330, %v284
      %v1371 = vmax.f32 %v1370, 0.0
      %v1372 = vrsqrt.pop %v1371
      %v1373 = vmul.f32 %v1371, %v1372
      %vm1374 = vcmp.eq.f32.partialorder %v1371, inf
      %v1375 = vsel %vm1374, %v1371, %v1373
      %vm1376 = vcmp.eq.f32.partialorder %v1371, 0.0
      %v1377 = vand.u32 %v1371, 2147483648
      %v1378 = vsel %vm1376, %v1377, %v1375
      %1379 = vst [vmem:[%s228 + $0x3] sm:$0x1] %v1378
      %1380 = vst [vmem:[%s235 + $0x3] sm:$0x1] %v1369
      %vm1381 = vcmp.eq.s32.totalorder %v1339, %v1369
      %vm1382 = vcmp.eq.s32.totalorder %v1340, %v1369
      %vm1383 = vcmp.eq.s32.totalorder %v1341, %v1369
      %vm1384 = vcmp.eq.s32.totalorder %v1342, %v1369
      %vm1385 = vcmp.eq.s32.totalorder %v1343, %v1369
      %vm1386 = vcmp.eq.s32.totalorder %v1344, %v1369
      %vm1387 = vcmp.eq.s32.totalorder %v1345, %v1369
      %vm1388 = vcmp.eq.s32.totalorder %v1346, %v1369
      %v1389 = vsel %vm1381, inf, %v1310
      %v1390 = vsel %vm1382, inf, %v1311
      %v1391 = vsel %vm1383, inf, %v1312
      %v1392 = vsel %vm1384, inf, %v1313
      %v1393 = vsel %vm1385, inf, %v1314
      %v1394 = vsel %vm1386, inf, %v1315
      %v1395 = vsel %vm1387, inf, %v1316
      %v1396 = vsel %vm1388, inf, %v1317
      %v1397 = vmin.f32 %v1389, %v1393
      %v1398 = vmin.f32 %v1390, %v1394
      %v1399 = vmin.f32 %v1391, %v1395
      %v1400 = vmin.f32 %v1392, %v1396
      %v1401 = vmin.f32 %v1397, %v1398
      %v1402 = vmin.f32 %v1399, %v1400
      %v1403 = vmin.f32 %v1401, %v1402
      %v1404 = vrot.slane %v1403, 4
      %v1405 = vmin.f32 %v1403, %v1404
      %v1406 = vrot.slane %v1405, 2
      %v1407 = vmin.f32 %v1405, %v1406
      %v1408 = vrot.slane %v1407, 1
      %v1409 = vmin.f32 %v1407, %v1408
      %vm1410 = vcmp.eq.f32.partialorder %v1389, %v1409
      %vm1411 = vcmp.eq.f32.partialorder %v1390, %v1409
      %vm1412 = vcmp.eq.f32.partialorder %v1391, %v1409
      %vm1413 = vcmp.eq.f32.partialorder %v1392, %v1409
      %vm1414 = vcmp.eq.f32.partialorder %v1393, %v1409
      %vm1415 = vcmp.eq.f32.partialorder %v1394, %v1409
      %vm1416 = vcmp.eq.f32.partialorder %v1395, %v1409
      %vm1417 = vcmp.eq.f32.partialorder %v1396, %v1409
      %v1418 = vsel %vm1410, %v1073, 64
      %v1419 = vsel %vm1411, %v1074, 64
      %v1420 = vsel %vm1412, %v1075, 64
      %v1421 = vsel %vm1413, %v1076, 64
      %v1422 = vsel %vm1414, %v1077, 64
      %v1423 = vsel %vm1415, %v1078, 64
      %v1424 = vsel %vm1416, %v1079, 64
      %v1425 = vsel %vm1417, %v1080, 64
      %vm1426 = vcmp.lt.s32.totalorder %v1418, %v1422
      %v1427 = vsel %vm1426, %v1418, %v1422
      %vm1428 = vcmp.lt.s32.totalorder %v1419, %v1423
      %v1429 = vsel %vm1428, %v1419, %v1423
      %vm1430 = vcmp.lt.s32.totalorder %v1420, %v1424
      %v1431 = vsel %vm1430, %v1420, %v1424
      %vm1432 = vcmp.lt.s32.totalorder %v1421, %v1425
      %v1433 = vsel %vm1432, %v1421, %v1425
      %vm1434 = vcmp.lt.s32.totalorder %v1427, %v1429
      %v1435 = vsel %vm1434, %v1427, %v1429
      %vm1436 = vcmp.lt.s32.totalorder %v1431, %v1433
      %v1437 = vsel %vm1436, %v1431, %v1433
      %vm1438 = vcmp.lt.s32.totalorder %v1435, %v1437
      %v1439 = vsel %vm1438, %v1435, %v1437
      %v1440 = vrot.slane %v1439, 4
      %vm1441 = vcmp.lt.s32.totalorder %v1439, %v1440
      %v1442 = vsel %vm1441, %v1439, %v1440
      %v1443 = vrot.slane %v1442, 2
      %vm1444 = vcmp.lt.s32.totalorder %v1442, %v1443
      %v1445 = vsel %vm1444, %v1442, %v1443
      %v1446 = vrot.slane %v1445, 1
      %vm1447 = vcmp.lt.s32.totalorder %v1445, %v1446
      %v1448 = vsel %vm1447, %v1445, %v1446
      %v1449 = vadd.f32 %v1409, %v284
      %v1450 = vmax.f32 %v1449, 0.0
      %v1451 = vrsqrt.pop %v1450
      %v1452 = vmul.f32 %v1450, %v1451
      %vm1453 = vcmp.eq.f32.partialorder %v1450, inf
      %v1454 = vsel %vm1453, %v1450, %v1452
      %vm1455 = vcmp.eq.f32.partialorder %v1450, 0.0
      %v1456 = vand.u32 %v1450, 2147483648
      %v1457 = vsel %vm1455, %v1456, %v1454
      %1458 = vst [vmem:[%s228 + $0x4] sm:$0x1] %v1457
      %1459 = vst [vmem:[%s235 + $0x4] sm:$0x1] %v1448
      %p1460 = scmp.lt.s32.totalorder %s19, 1
      %s1461 = scalar_select %p1460, %s19, 1
      %p1462 = scmp.lt.s32.totalorder %s20, 0
      %s1463 = scalar_select %p1462, %s20, 0
      %s1464 = sadd.s32 %s1463, %s1461
      %s1465 = smul.addr %s1464, 8
      %s1466 = scalar_lea.vmem %s2, %s1465
      %p1467 = scmp.lt.s32.totalorder %s19, 1
      %s1468 = scalar_select %p1467, %s19, 1
      %p1469 = scmp.lt.s32.totalorder %s20, 0
      %s1470 = scalar_select %p1469, %s20, 0
      %s1471 = sadd.s32 %s1470, %s1468
      %s1472 = smul.addr %s1471, 8
      %s1473 = scalar_lea.vmem %s3, %s1472
      // Predicated region
      $region29: #{knn_pallas.1} parent=27 // pred_check
        %p1474 = pneg %p101
      $region30: #{knn_pallas.1} parent=27 // pred_check_branch
        %1476 = sbr.rel (%p1474) target = $region32
      $region31: #{knn_pallas.1} parent=27 // pred_region
        _
      $region32: #{knn_pallas.1} parent=27 // pred_fallthru
        _
      // Predicated region
      $region33: #{knn_pallas.1} parent=27 // pred_check
        %p1477 = pneg %p129
      $region34: #{knn_pallas.1} parent=27 // pred_check_branch
        %1479 = sbr.rel (%p1477) target = $region36
      $region35: #{knn_pallas.1} parent=27 // pred_region
        _
      $region36: #{knn_pallas.1} parent=27 // pred_fallthru
        _
    $region28: #{knn_pallas.1} parent=5 // pred_fallthru
      _
    %p1480 = scmp.le.s32.totalorder 2, %s10
    // Predicated region
    $region37: #{knn_pallas.1} parent=5 // pred_check
      %p1481 = pneg %p1480
    $region38: #{knn_pallas.1} parent=5 // pred_check_branch
      %1483 = sbr.rel (%p1481) target = $region40
    $region39: #{knn_pallas.1} parent=5 // pred_region
      %s1484 = ssub.s32 %s10, 2
      // Predicated region
      $region41: #{knn_pallas.1} parent=39 // pred_check
        %p1485 = pneg %p107
      $region42: #{knn_pallas.1} parent=39 // pred_check_branch
        %1487 = sbr.rel (%p1485) target = $region44
      $region43: #{knn_pallas.1} parent=39 // pred_region
        %p1488 = scmp.lt.s32.totalorder %s21, 1
        %s1489 = scalar_select %p1488, %s21, 1
        %p1490 = scmp.lt.s32.totalorder %s22, 0
        %s1491 = scalar_select %p1490, %s22, 0
        %s1492 = sadd.s32 %s1491, %s1489
        %s1493 = smul.addr %s1492, 8
        %s1494 = scalar_lea.vmem %s2, %s1493
      $region44: #{knn_pallas.1} parent=39 // pred_fallthru
        _
      // Predicated region
      $region45: #{knn_pallas.1} parent=39 // pred_check
        %p1495 = pneg %p135
      $region46: #{knn_pallas.1} parent=39 // pred_check_branch
        %1497 = sbr.rel (%p1495) target = $region48
      $region47: #{knn_pallas.1} parent=39 // pred_region
        %p1498 = scmp.lt.s32.totalorder %s21, 1
        %s1499 = scalar_select %p1498, %s21, 1
        %p1500 = scmp.lt.s32.totalorder %s22, 0
        %s1501 = scalar_select %p1500, %s22, 0
        %s1502 = sadd.s32 %s1501, %s1499
        %s1503 = smul.addr %s1502, 8
        %s1504 = scalar_lea.vmem %s3, %s1503
      $region48: #{knn_pallas.1} parent=39 // pred_fallthru
        _
    $region40: #{knn_pallas.1} parent=5 // pred_fallthru
      _
  $region6: #{knn_pallas.1} parent=0 // loop_footer
    %s14 = sadd.s32 1, %s10
  $region7: #{knn_pallas.1} parent=0 // loop_footer_branch
    %9 = sbr.rel target = $region3
  $region8: #{knn_pallas.1} parent=0 // loop_exit
    _

</llo_original>
